<compile_context>
chip_gen: v7x
topology: tpu7x:2x2x1
jax: 0.10.0
libtpu: 0.0.40
codegen_flags: <defaults>
</compile_context>

<pallas_src>
import functools

import jax
import jax.numpy as jnp
from jax.experimental import pallas as pl
from jax.experimental.pallas import tpu as pltpu

# ----- model dimensions -----
DIN = 5      # input features (3 origin + 2 direction)
H2 = 128     # trunk width
HP = 64      # post-block hidden width
NEG_SLOPE = 0.01  # PyTorch LeakyReLU default

# ----- bf16 weight-slab row offsets (all multiples of 16 -> bf16 sublane tiles) -----
R_W2 = 0                 # (128, 128) combined encoder layer 2 (block-diag, lanes 64:127 zero)
R_WR = R_W2 + H2         # 4 x (128, 128) residual weights
R_WP1 = R_WR + 4 * H2    # (128, 128) post layer 1 (rows 64:127 zero)
R_WP2 = R_WP1 + H2       # (1, 128)   post layer 2 (lanes 64:127 zero)
R_TOT = R_WP2 + 16       # pad rows to a bf16 sublane-tile multiple -> (784, 128)

# ----- f32 aux slab (128, 16): layer-1 weights as columns 0:5 + all biases -----
C_B1, C_B2, C_BR0, C_BP1, C_BP2 = 5, 6, 7, 11, 12
NA_COLS = 16


def _lrelu(v):
    return jnp.maximum(v, NEG_SLOPE * v)


def _mlp_kernel(x_ref, w_ref, a_ref, o_ref):
    # x_ref: (DIN, TB)    transposed input block (batch on the lane axis)
    # w_ref: (R_TOT, 128) packed bf16 weights, VMEM-resident across grid steps
    # a_ref: (128, 16)    f32 aux slab: layer-1 weight columns + bias columns
    # o_ref: (1, TB)      lane-dense output block
    tb = x_ref.shape[1]
    bf = jnp.bfloat16

    # --- fused encoder layer 1: K=5 -> 5 VPU broadcast FMAs (f32, keeps MXU free) ---
    # rows 64:127 of the aux weight/bias columns are zero => h1 rows 64:127 == 0.
    h1 = jnp.broadcast_to(a_ref[:, C_B1:C_B1 + 1], (H2, tb))
    for k in range(DIN):
        h1 = h1 + a_ref[:, k:k + 1] * x_ref[k:k + 1, :]
    h1 = _lrelu(h1)

    # --- fused encoder layer 2: full (128,128) bf16 tile (padded K) -> out1 ---
    out1 = _lrelu(
        jnp.dot(w_ref[R_W2:R_W2 + H2, :], h1.astype(bf),
                preferred_element_type=jnp.float32)
        + a_ref[:, C_B2:C_B2 + 1])

    # --- 4 residual blocks: h = leaky_relu(h + W h + b)  (bf16 matmul, f32 epilogue) ---
    h = out1
    for i in range(4):
        wr = w_ref[R_WR + i * H2:R_WR + (i + 1) * H2, :]
        h = _lrelu(h
                   + jnp.dot(wr, h.astype(bf), preferred_element_type=jnp.float32)
                   + a_ref[:, C_BR0 + i:C_BR0 + i + 1])

    # --- post block on (out1 + out2) ---
    z = out1 + h
    p1 = _lrelu(
        jnp.dot(w_ref[R_WP1:R_WP1 + H2, :], z.astype(bf),
                preferred_element_type=jnp.float32)
        + a_ref[:, C_BP1:C_BP1 + 1])          # rows 64:127 stay exactly 0
    z2 = (jnp.dot(w_ref[R_WP2:R_WP2 + 1, :], p1.astype(bf),
                  preferred_element_type=jnp.float32)
          + a_ref[0:1, C_BP2:C_BP2 + 1])
    o_ref[...] = (pl.reciprocal(1.0 + jnp.exp(-z2), approx=True)).astype(o_ref.dtype)


@functools.partial(jax.jit, static_argnames=("block_b",))
def mlp_forward(x, w_slab, a_slab, *, block_b=1024):
    """x: (B, 5) float32 -> (B, 1) float32 (sigmoid output)."""
    assert block_b % 128 == 0 and block_b >= 128, "block_b must be a multiple of 128"
    B = x.shape[0]
    bp = -(-B // 128) * 128               # pad batch to a lane multiple
    tb = min(block_b, bp)                 # tile: multiple of 128 in every case
    if bp // tb < 2:                      # guarantee >=2 grid steps (v7x: 2 TensorCores)
        tb = max(128, (bp // 2) // 128 * 128)
    bp = -(-bp // tb) * tb
    if bp // tb < 2:
        bp = 2 * tb                       # tiny batch: pad to two 128-lane blocks

    xt = x.astype(jnp.float32).T          # (5, B): batch on the lane axis
    if bp != B:
        xt = jnp.pad(xt, ((0, 0), (0, bp - B)))

    # NOTE: weight/bias index_maps are constant -> fetched once, VMEM-resident
    # for the whole grid (no per-step DMA traffic).
    out = pl.pallas_call(
        _mlp_kernel,
        out_shape=jax.ShapeDtypeStruct((1, bp), jnp.float32),
        grid_spec=pltpu.PrefetchScalarGridSpec(
            num_scalar_prefetch=0,
            grid=(bp // tb,),
            in_specs=[
                pl.BlockSpec((DIN, tb), lambda i: (0, i)),        # streamed x
                pl.BlockSpec(w_slab.shape, lambda i: (0, 0)),     # resident bf16 weights
                pl.BlockSpec(a_slab.shape, lambda i: (0, 0)),     # resident f32 aux/bias
            ],
            out_specs=pl.BlockSpec((1, tb), lambda i: (0, i)),    # lane-dense output
        ),
        compiler_params=pltpu.CompilerParams(
            dimension_semantics=("parallel",)),
    )(xt, w_slab, a_slab)
    return out[0, :B].reshape(B, 1)


# ----------------- parameter construction / packing (host side) -----------------
def init_params(key):
    """PyTorch-style Linear params: weight (out, in), bias (out,)."""
    def linear(k, fan_in, fan_out):
        kw, kb = jax.random.split(k)
        bound = 1.0 / (fan_in ** 0.5)
        w = jax.random.uniform(kw, (fan_out, fan_in), jnp.float32, -bound, bound)
        b = jax.random.uniform(kb, (fan_out,), jnp.float32, -bound, bound)
        return w, b

    keys = jax.random.split(key, 10)
    return {
        "enc3_1": linear(keys[0], 3, 32),
        "enc3_2": linear(keys[1], 32, 64),
        "enc2_1": linear(keys[2], 2, 32),
        "enc2_2": linear(keys[3], 32, 64),
        "res": [linear(keys[4 + i], 128, 128) for i in range(4)],
        "post1": linear(keys[8], 128, 64),
        "post2": linear(keys[9], 64, 1),
    }


def pack_params(p):
    """Pack MXU matrices into a bf16 (R_TOT,128) slab + f32 (128,16) aux/bias slab."""
    W = jnp.zeros((R_TOT, 128), jnp.float32)
    A = jnp.zeros((H2, NA_COLS), jnp.float32)

    w31, b31 = p["enc3_1"]; w21, b21 = p["enc2_1"]
    w32, b32 = p["enc3_2"]; w22, b22 = p["enc2_2"]
    # combined first layer (block-diagonal over origin/direction) -> f32 aux columns 0:5
    A = A.at[0:32, 0:3].set(w31)
    A = A.at[32:64, 3:5].set(w21)
    A = A.at[0:32, C_B1].set(b31)
    A = A.at[32:64, C_B1].set(b21)
    # combined second layer (block-diagonal), padded to a full 128-lane tile
    W = W.at[R_W2 + 0:R_W2 + 64, 0:32].set(w32)
    W = W.at[R_W2 + 64:R_W2 + 128, 32:64].set(w22)
    A = A.at[0:64, C_B2].set(b32)
    A = A.at[64:128, C_B2].set(b22)
    # residual blocks
    for i, (w, b) in enumerate(p["res"]):
        W = W.at[R_WR + i * H2:R_WR + (i + 1) * H2, :].set(w)
        A = A.at[:, C_BR0 + i].set(b)
    # post block (post1 rows 64:127 and post2 lanes 64:127 stay zero)
    wp1, bp1 = p["post1"]; wp2, bp2 = p["post2"]
    W = W.at[R_WP1:R_WP1 + HP, :].set(wp1)
    A = A.at[0:HP, C_BP1].set(bp1)
    W = W.at[R_WP2:R_WP2 + 1, 0:HP].set(wp2)
    A = A.at[0:1, C_BP2].set(bp2)
    return W.astype(jnp.bfloat16), A


def reference_forward(x, p):
    """Pure-JAX f32 replica of the PyTorch forward()."""
    def lin(h, wb):
        w, b = wb
        return h @ w.T + b
    def lrelu(v):
        return jnp.where(v >= 0, v, NEG_SLOPE * v)

    origin, direction = x[:, 0:3], x[:, 3:5]
    o1 = lrelu(lin(lrelu(lin(origin, p["enc3_1"])), p["enc3_2"]))
    o2 = lrelu(lin(lrelu(lin(direction, p["enc2_1"])), p["enc2_2"]))
    out1 = jnp.concatenate([o1, o2], axis=1)
    h = out1
    for wb in p["res"]:
        h = lrelu(h + lin(h, wb))
    z = lrelu(lin(out1 + h, p["post1"]))
    return jax.nn.sigmoid(lin(z, p["post2"]))


if __name__ == "__main__":
    key = jax.random.PRNGKey(0)
    kx, kp, kx2 = jax.random.split(key, 3)
    params = init_params(kp)
    w_slab, a_slab = pack_params(params)

    # small demo batch (padded to two 128-lane blocks -> exercises the grid + both cores)
    B = 8
    x = jax.random.normal(kx, (B, DIN), jnp.float32)
    out = jax.block_until_ready(mlp_forward(x, w_slab, a_slab))
    ref = reference_forward(x, params)
    assert out.shape == (B, 1)
    # bf16 MXU operands (f32 accumulation) => loosened tolerance vs the f32 reference
    assert jnp.allclose(out, ref, atol=3e-2, rtol=1e-3), float(jnp.max(jnp.abs(out - ref)))

    # gridded + padded path (B not a multiple of 128, explicit 128-wide tiles)
    B2 = 200
    x2 = jax.random.normal(kx2, (B2, DIN), jnp.float32)
    out2 = jax.block_until_ready(mlp_forward(x2, w_slab, a_slab, block_b=128))
    ref2 = reference_forward(x2, params)
    assert out2.shape == (B2, 1)
    assert jnp.allclose(out2, ref2, atol=3e-2, rtol=1e-3), float(jnp.max(jnp.abs(out2 - ref2)))

    print("KERNEL_OK")
</pallas_src>

<mosaic_0001>
module attributes {stable_mosaic.version = 11 : i64} {
  func.func @_mlp_kernel(%arg0: i32, %arg1: memref<5x128xf32, #tpu.memory_space<vmem>>, %arg2: memref<784x128xbf16, #tpu.memory_space<vmem>>, %arg3: memref<128x16xf32, #tpu.memory_space<vmem>>, %arg4: memref<1x128xf32, #tpu.memory_space<vmem>>) attributes {dimension_semantics = [#tpu.dimension_semantics<parallel>], iteration_bounds = array<i64: 2>, scalar_prefetch = 0 : i64, scratch_operands = 0 : i64, tpu.core_type = #tpu.core_type<tc>, window_params = [{transform_indices = @transform_0, window_bounds = array<i64: 5, 128>}, {pipeline_mode = #tpu.pipeline_mode<synchronous>, transform_indices = @transform_1, window_bounds = array<i64: 784, 128>}, {pipeline_mode = #tpu.pipeline_mode<synchronous>, transform_indices = @transform_2, window_bounds = array<i64: 128, 16>}, {transform_indices = @transform_3, window_bounds = array<i64: 1, 128>}]} {
    %c0 = arith.constant 0 : index
    %c5 = arith.constant 5 : index
    %0 = vector.load %arg3[%c0, %c5] : memref<128x16xf32, #tpu.memory_space<vmem>>, vector<128x1xf32>
    %1 = vector.shape_cast %0 : vector<128x1xf32> to vector<128x1xf32>
    %2 = vector.broadcast %1 : vector<128x1xf32> to vector<128x128xf32>
    %c0_0 = arith.constant 0 : index
    %c0_1 = arith.constant 0 : index
    %3 = vector.load %arg3[%c0_0, %c0_1] : memref<128x16xf32, #tpu.memory_space<vmem>>, vector<128x1xf32>
    %c0_2 = arith.constant 0 : index
    %c0_3 = arith.constant 0 : index
    %4 = vector.load %arg1[%c0_2, %c0_3] : memref<5x128xf32, #tpu.memory_space<vmem>>, vector<1x128xf32>
    %5 = vector.broadcast %3 : vector<128x1xf32> to vector<128x128xf32>
    %6 = vector.broadcast %4 : vector<1x128xf32> to vector<128x128xf32>
    %7 = arith.mulf %5, %6 : vector<128x128xf32>
    %8 = arith.addf %2, %7 : vector<128x128xf32>
    %c0_4 = arith.constant 0 : index
    %c1 = arith.constant 1 : index
    %9 = vector.load %arg3[%c0_4, %c1] : memref<128x16xf32, #tpu.memory_space<vmem>>, vector<128x1xf32>
    %c1_5 = arith.constant 1 : index
    %c0_6 = arith.constant 0 : index
    %10 = vector.load %arg1[%c1_5, %c0_6] : memref<5x128xf32, #tpu.memory_space<vmem>>, vector<1x128xf32>
    %11 = vector.broadcast %9 : vector<128x1xf32> to vector<128x128xf32>
    %12 = vector.broadcast %10 : vector<1x128xf32> to vector<128x128xf32>
    %13 = arith.mulf %11, %12 : vector<128x128xf32>
    %14 = arith.addf %8, %13 : vector<128x128xf32>
    %c0_7 = arith.constant 0 : index
    %c2 = arith.constant 2 : index
    %15 = vector.load %arg3[%c0_7, %c2] : memref<128x16xf32, #tpu.memory_space<vmem>>, vector<128x1xf32>
    %c2_8 = arith.constant 2 : index
    %c0_9 = arith.constant 0 : index
    %16 = vector.load %arg1[%c2_8, %c0_9] : memref<5x128xf32, #tpu.memory_space<vmem>>, vector<1x128xf32>
    %17 = vector.broadcast %15 : vector<128x1xf32> to vector<128x128xf32>
    %18 = vector.broadcast %16 : vector<1x128xf32> to vector<128x128xf32>
    %19 = arith.mulf %17, %18 : vector<128x128xf32>
    %20 = arith.addf %14, %19 : vector<128x128xf32>
    %c0_10 = arith.constant 0 : index
    %c3 = arith.constant 3 : index
    %21 = vector.load %arg3[%c0_10, %c3] : memref<128x16xf32, #tpu.memory_space<vmem>>, vector<128x1xf32>
    %c3_11 = arith.constant 3 : index
    %c0_12 = arith.constant 0 : index
    %22 = vector.load %arg1[%c3_11, %c0_12] : memref<5x128xf32, #tpu.memory_space<vmem>>, vector<1x128xf32>
    %23 = vector.broadcast %21 : vector<128x1xf32> to vector<128x128xf32>
    %24 = vector.broadcast %22 : vector<1x128xf32> to vector<128x128xf32>
    %25 = arith.mulf %23, %24 : vector<128x128xf32>
    %26 = arith.addf %20, %25 : vector<128x128xf32>
    %c0_13 = arith.constant 0 : index
    %c4 = arith.constant 4 : index
    %27 = vector.load %arg3[%c0_13, %c4] : memref<128x16xf32, #tpu.memory_space<vmem>>, vector<128x1xf32>
    %c4_14 = arith.constant 4 : index
    %c0_15 = arith.constant 0 : index
    %28 = vector.load %arg1[%c4_14, %c0_15] : memref<5x128xf32, #tpu.memory_space<vmem>>, vector<1x128xf32>
    %29 = vector.broadcast %27 : vector<128x1xf32> to vector<128x128xf32>
    %30 = vector.broadcast %28 : vector<1x128xf32> to vector<128x128xf32>
    %31 = arith.mulf %29, %30 : vector<128x128xf32>
    %32 = arith.addf %26, %31 : vector<128x128xf32>
    %cst = arith.constant 0.00999999977 : f32
    %33 = vector.broadcast %cst : f32 to vector<128x128xf32>
    %34 = arith.mulf %33, %32 : vector<128x128xf32>
    %35 = arith.maximumf %32, %34 : vector<128x128xf32>
    %c0_16 = arith.constant 0 : index
    %c0_17 = arith.constant 0 : index
    %36 = vector.load %arg2[%c0_16, %c0_17] : memref<784x128xbf16, #tpu.memory_space<vmem>>, vector<128x128xbf16>
    %37 = arith.truncf %35 : vector<128x128xf32> to vector<128x128xbf16>
    %cst_18 = arith.constant dense<0.000000e+00> : vector<128x128xf32>
    %38 = tpu.matmul %36, %37, %cst_18 {dimension_numbers = #tpu.dot_dimension_numbers<[1], [0], [0], [1], [0, 0, 1, 1], [], []>} : vector<128x128xbf16>, vector<128x128xbf16>, vector<128x128xf32> -> vector<128x128xf32>
    %c0_19 = arith.constant 0 : index
    %c6 = arith.constant 6 : index
    %39 = vector.load %arg3[%c0_19, %c6] : memref<128x16xf32, #tpu.memory_space<vmem>>, vector<128x1xf32>
    %40 = vector.broadcast %39 : vector<128x1xf32> to vector<128x128xf32>
    %41 = arith.addf %38, %40 : vector<128x128xf32>
    %cst_20 = arith.constant 0.00999999977 : f32
    %42 = vector.broadcast %cst_20 : f32 to vector<128x128xf32>
    %43 = arith.mulf %42, %41 : vector<128x128xf32>
    %44 = arith.maximumf %41, %43 : vector<128x128xf32>
    %c128 = arith.constant 128 : index
    %c0_21 = arith.constant 0 : index
    %45 = vector.load %arg2[%c128, %c0_21] : memref<784x128xbf16, #tpu.memory_space<vmem>>, vector<128x128xbf16>
    %46 = arith.truncf %44 : vector<128x128xf32> to vector<128x128xbf16>
    %cst_22 = arith.constant dense<0.000000e+00> : vector<128x128xf32>
    %47 = tpu.matmul %45, %46, %cst_22 {dimension_numbers = #tpu.dot_dimension_numbers<[1], [0], [0], [1], [0, 0, 1, 1], [], []>} : vector<128x128xbf16>, vector<128x128xbf16>, vector<128x128xf32> -> vector<128x128xf32>
    %48 = arith.addf %44, %47 : vector<128x128xf32>
    %c0_23 = arith.constant 0 : index
    %c7 = arith.constant 7 : index
    %49 = vector.load %arg3[%c0_23, %c7] : memref<128x16xf32, #tpu.memory_space<vmem>>, vector<128x1xf32>
    %50 = vector.broadcast %49 : vector<128x1xf32> to vector<128x128xf32>
    %51 = arith.addf %48, %50 : vector<128x128xf32>
    %cst_24 = arith.constant 0.00999999977 : f32
    %52 = vector.broadcast %cst_24 : f32 to vector<128x128xf32>
    %53 = arith.mulf %52, %51 : vector<128x128xf32>
    %54 = arith.maximumf %51, %53 : vector<128x128xf32>
    %c256 = arith.constant 256 : index
    %c0_25 = arith.constant 0 : index
    %55 = vector.load %arg2[%c256, %c0_25] : memref<784x128xbf16, #tpu.memory_space<vmem>>, vector<128x128xbf16>
    %56 = arith.truncf %54 : vector<128x128xf32> to vector<128x128xbf16>
    %cst_26 = arith.constant dense<0.000000e+00> : vector<128x128xf32>
    %57 = tpu.matmul %55, %56, %cst_26 {dimension_numbers = #tpu.dot_dimension_numbers<[1], [0], [0], [1], [0, 0, 1, 1], [], []>} : vector<128x128xbf16>, vector<128x128xbf16>, vector<128x128xf32> -> vector<128x128xf32>
    %58 = arith.addf %54, %57 : vector<128x128xf32>
    %c0_27 = arith.constant 0 : index
    %c8 = arith.constant 8 : index
    %59 = vector.load %arg3[%c0_27, %c8] : memref<128x16xf32, #tpu.memory_space<vmem>>, vector<128x1xf32>
    %60 = vector.broadcast %59 : vector<128x1xf32> to vector<128x128xf32>
    %61 = arith.addf %58, %60 : vector<128x128xf32>
    %cst_28 = arith.constant 0.00999999977 : f32
    %62 = vector.broadcast %cst_28 : f32 to vector<128x128xf32>
    %63 = arith.mulf %62, %61 : vector<128x128xf32>
    %64 = arith.maximumf %61, %63 : vector<128x128xf32>
    %c384 = arith.constant 384 : index
    %c0_29 = arith.constant 0 : index
    %65 = vector.load %arg2[%c384, %c0_29] : memref<784x128xbf16, #tpu.memory_space<vmem>>, vector<128x128xbf16>
    %66 = arith.truncf %64 : vector<128x128xf32> to vector<128x128xbf16>
    %cst_30 = arith.constant dense<0.000000e+00> : vector<128x128xf32>
    %67 = tpu.matmul %65, %66, %cst_30 {dimension_numbers = #tpu.dot_dimension_numbers<[1], [0], [0], [1], [0, 0, 1, 1], [], []>} : vector<128x128xbf16>, vector<128x128xbf16>, vector<128x128xf32> -> vector<128x128xf32>
    %68 = arith.addf %64, %67 : vector<128x128xf32>
    %c0_31 = arith.constant 0 : index
    %c9 = arith.constant 9 : index
    %69 = vector.load %arg3[%c0_31, %c9] : memref<128x16xf32, #tpu.memory_space<vmem>>, vector<128x1xf32>
    %70 = vector.broadcast %69 : vector<128x1xf32> to vector<128x128xf32>
    %71 = arith.addf %68, %70 : vector<128x128xf32>
    %cst_32 = arith.constant 0.00999999977 : f32
    %72 = vector.broadcast %cst_32 : f32 to vector<128x128xf32>
    %73 = arith.mulf %72, %71 : vector<128x128xf32>
    %74 = arith.maximumf %71, %73 : vector<128x128xf32>
    %c512 = arith.constant 512 : index
    %c0_33 = arith.constant 0 : index
    %75 = vector.load %arg2[%c512, %c0_33] : memref<784x128xbf16, #tpu.memory_space<vmem>>, vector<128x128xbf16>
    %76 = arith.truncf %74 : vector<128x128xf32> to vector<128x128xbf16>
    %cst_34 = arith.constant dense<0.000000e+00> : vector<128x128xf32>
    %77 = tpu.matmul %75, %76, %cst_34 {dimension_numbers = #tpu.dot_dimension_numbers<[1], [0], [0], [1], [0, 0, 1, 1], [], []>} : vector<128x128xbf16>, vector<128x128xbf16>, vector<128x128xf32> -> vector<128x128xf32>
    %78 = arith.addf %74, %77 : vector<128x128xf32>
    %c0_35 = arith.constant 0 : index
    %c10 = arith.constant 10 : index
    %79 = vector.load %arg3[%c0_35, %c10] : memref<128x16xf32, #tpu.memory_space<vmem>>, vector<128x1xf32>
    %80 = vector.broadcast %79 : vector<128x1xf32> to vector<128x128xf32>
    %81 = arith.addf %78, %80 : vector<128x128xf32>
    %cst_36 = arith.constant 0.00999999977 : f32
    %82 = vector.broadcast %cst_36 : f32 to vector<128x128xf32>
    %83 = arith.mulf %82, %81 : vector<128x128xf32>
    %84 = arith.maximumf %81, %83 : vector<128x128xf32>
    %85 = arith.addf %44, %84 : vector<128x128xf32>
    %c640 = arith.constant 640 : index
    %c0_37 = arith.constant 0 : index
    %86 = vector.load %arg2[%c640, %c0_37] : memref<784x128xbf16, #tpu.memory_space<vmem>>, vector<128x128xbf16>
    %87 = arith.truncf %85 : vector<128x128xf32> to vector<128x128xbf16>
    %cst_38 = arith.constant dense<0.000000e+00> : vector<128x128xf32>
    %88 = tpu.matmul %86, %87, %cst_38 {dimension_numbers = #tpu.dot_dimension_numbers<[1], [0], [0], [1], [0, 0, 1, 1], [], []>} : vector<128x128xbf16>, vector<128x128xbf16>, vector<128x128xf32> -> vector<128x128xf32>
    %c0_39 = arith.constant 0 : index
    %c11 = arith.constant 11 : index
    %89 = vector.load %arg3[%c0_39, %c11] : memref<128x16xf32, #tpu.memory_space<vmem>>, vector<128x1xf32>
    %90 = vector.broadcast %89 : vector<128x1xf32> to vector<128x128xf32>
    %91 = arith.addf %88, %90 : vector<128x128xf32>
    %cst_40 = arith.constant 0.00999999977 : f32
    %92 = vector.broadcast %cst_40 : f32 to vector<128x128xf32>
    %93 = arith.mulf %92, %91 : vector<128x128xf32>
    %94 = arith.maximumf %91, %93 : vector<128x128xf32>
    %c768 = arith.constant 768 : index
    %c0_41 = arith.constant 0 : index
    %95 = vector.load %arg2[%c768, %c0_41] : memref<784x128xbf16, #tpu.memory_space<vmem>>, vector<1x128xbf16>
    %96 = arith.truncf %94 : vector<128x128xf32> to vector<128x128xbf16>
    %cst_42 = arith.constant dense<0.000000e+00> : vector<1x128xf32>
    %97 = tpu.matmul %95, %96, %cst_42 {dimension_numbers = #tpu.dot_dimension_numbers<[1], [0], [0], [1], [0, 0, 1, 1], [], []>} : vector<1x128xbf16>, vector<128x128xbf16>, vector<1x128xf32> -> vector<1x128xf32>
    %c0_43 = arith.constant 0 : index
    %c12 = arith.constant 12 : index
    %98 = vector.load %arg3[%c0_43, %c12] : memref<128x16xf32, #tpu.memory_space<vmem>>, vector<1x1xf32>
    %99 = vector.broadcast %98 : vector<1x1xf32> to vector<1x128xf32>
    %100 = arith.addf %97, %99 : vector<1x128xf32>
    %cst_44 = arith.constant 0.000000e+00 : f32
    %101 = vector.broadcast %cst_44 : f32 to vector<1x128xf32>
    %102 = arith.subf %101, %100 : vector<1x128xf32>
    %103 = math.exp %102 : vector<1x128xf32>
    %cst_45 = arith.constant 1.000000e+00 : f32
    %104 = vector.broadcast %cst_45 : f32 to vector<1x128xf32>
    %105 = arith.addf %104, %103 : vector<1x128xf32>
    %106 = tpu.reciprocal %105 {approx = true} : vector<1x128xf32> -> vector<1x128xf32>
    %c0_46 = arith.constant 0 : index
    %c0_47 = arith.constant 0 : index
    %107 = vector.load %arg4[%c0_46, %c0_47] : memref<1x128xf32, #tpu.memory_space<vmem>>, vector<1x128xf32>
    tpu.vector_store %arg4[%c0_46, %c0_47], %106 {strides = array<i32>} : memref<1x128xf32, #tpu.memory_space<vmem>>, vector<1x128xf32>,
    return
  }
  func.func @transform_0(%arg0: i32) -> (i32, i32) {
    %c0_i32 = arith.constant 0 : i32
    %c0_i32_0 = arith.constant 0 : i32
    return %c0_i32, %arg0 : i32, i32
  }
  func.func @transform_1(%arg0: i32) -> (i32, i32) {
    %c0_i32 = arith.constant 0 : i32
    %c0_i32_0 = arith.constant 0 : i32
    %c0_i32_1 = arith.constant 0 : i32
    return %c0_i32, %c0_i32_0 : i32, i32
  }
  func.func @transform_2(%arg0: i32) -> (i32, i32) {
    %c0_i32 = arith.constant 0 : i32
    %c0_i32_0 = arith.constant 0 : i32
    %c0_i32_1 = arith.constant 0 : i32
    return %c0_i32, %c0_i32_0 : i32, i32
  }
  func.func @transform_3(%arg0: i32) -> (i32, i32) {
    %c0_i32 = arith.constant 0 : i32
    %c0_i32_0 = arith.constant 0 : i32
    return %c0_i32, %arg0 : i32, i32
  }
}

</mosaic_0001>

<llo_original>
// kernel: mlp_forward.1
$region0: #{mlp_forward.1}
  #allocation0 [shape = 'u32[]', space=smem, size = 0x4, offset = 0x4, fixed_abs, tag = 'smem constant byte address 0x4 - core index']
  #allocation1 [shape = 'u32[144,128]{1,0:T(1,128)}', space=vmem, size = 0x12000, scoped, tag = 'internal scratch']
  %s0 = inlined_call_operand.vmem [shape: f32[5,256], index: 0, kind: input, shape index: {}]
  %s1 = inlined_call_operand.hbm [shape: bf16[784,128], index: 1, kind: input, shape index: {}]
  %s2 = inlined_call_operand.vmem [shape: f32[128,16], index: 2, kind: input, shape index: {}]
  %s3 = inlined_call_operand.vmem [shape: f32[1,256], index: 3, kind: output, shape index: {}]
  %s4 = sld [smem:[#allocation0]]
  $region49: #{mlp_forward.1} parent=0
    _
  %s6 = ssub.s32 1, %s4
  %s7 = scalar_select 0, %s6, %s4
  $region1: #{mlp_forward.1} parent=0
    #allocation2 [shape = 'u8[200704]{0}', space=vmem, size = 0x31000, scoped, tag = 'input window, operand 1, single buffered']
    #allocation3 [shape = 's32[2]{0}', space=sflag, size = 0x8, scoped, tag = 'scoped memory for mlp_forward.1']
    %8 = vsyncpa [#allocation3], 0
    loop: start=0, step=1, limit=4
    $region2: #{mlp_forward.1} parent=1 // loop_pre_header
      _
    $region3: #{mlp_forward.1} parent=1 // loop_header
      %s10 = sphi 0, %s14
      %p11 = scmp.ge.s32.totalorder %s10, 4
      %s20 = sphi 0, %s22
      %s23 = sphi 0, %s20
      %s24 = sphi 0, %s23
      %s40 = sphi 0, %s24
      %s44 = sphi 0, %s44
      %s46 = sphi 0, %s44
      %s47 = sphi 0, %s46
      %s61 = sphi 0, %s47
      %s65 = sphi 0, %s65
      %s67 = sphi 0, %s65
      %s68 = sphi 0, %s67
      %s82 = sphi 0, %s68
      %s88 = sphi 0, %s90
      %s91 = sphi 0, %s88
      %s92 = sphi 0, %s91
      %s108 = sphi 0, %s92
    $region4: #{mlp_forward.1} parent=1 // loop_header_branch
      %13 = sbr.rel (%p11) target = $region8
    $region5: #{mlp_forward.1} parent=1 // loop_body
      %s15 = ssub.s32 %s10, 1
      %s16 = ssub.s32 %s10, 2
      %s17 = sadd.s32 %s10, 1
      %s18 = ssub.s32 %s10, %s17
      %p19 = scmp.eq.s32.totalorder %s18, 0
      %s21 = sadd.s32 %s20, 1
      %s22 = scalar_select %p19, %s20, %s21
      %p25 = pneg %p19
      %p26 = scmp.eq.s32.totalorder %s10, 1
      %p27 = por %p25, %p26
      %p28 = scmp.ne.s32.totalorder %s20, %s23
      %p29 = scmp.eq.s32.totalorder %s10, 0
      %p30 = por %p28, %p29
      %p31 = scmp.ne.s32.totalorder %s20, %s23
      %p32 = scmp.eq.s32.totalorder %s15, 1
      %p33 = por %p31, %p32
      %p34 = scmp.ne.s32.totalorder %s23, %s24
      %p35 = scmp.eq.s32.totalorder %s15, 0
      %p36 = por %p34, %p35
      %p37 = scmp.ne.s32.totalorder %s23, %s24
      %p38 = scmp.eq.s32.totalorder %s16, 1
      %p39 = por %p37, %p38
      %p41 = scmp.ne.s32.totalorder %s24, %s40
      %p42 = scmp.eq.s32.totalorder %s16, 0
      %p43 = por %p41, %p42
      %s45 = sadd.s32 %s44, 1
      %p48 = scmp.eq.s32.totalorder %s10, 1
      %p49 = scmp.ne.s32.totalorder %s44, %s46
      %p50 = scmp.eq.s32.totalorder %s10, 0
      %p51 = por %p49, %p50
      %p52 = scmp.ne.s32.totalorder %s44, %s46
      %p53 = scmp.eq.s32.totalorder %s15, 1
      %p54 = por %p52, %p53
      %p55 = scmp.ne.s32.totalorder %s46, %s47
      %p56 = scmp.eq.s32.totalorder %s15, 0
      %p57 = por %p55, %p56
      %p58 = scmp.ne.s32.totalorder %s46, %s47
      %p59 = scmp.eq.s32.totalorder %s16, 1
      %p60 = por %p58, %p59
      %p62 = scmp.ne.s32.totalorder %s47, %s61
      %p63 = scmp.eq.s32.totalorder %s16, 0
      %p64 = por %p62, %p63
      %s66 = sadd.s32 %s65, 1
      %p69 = scmp.eq.s32.totalorder %s10, 1
      %p70 = scmp.ne.s32.totalorder %s65, %s67
      %p71 = scmp.eq.s32.totalorder %s10, 0
      %p72 = por %p70, %p71
      %p73 = scmp.ne.s32.totalorder %s65, %s67
      %p74 = scmp.eq.s32.totalorder %s15, 1
      %p75 = por %p73, %p74
      %p76 = scmp.ne.s32.totalorder %s67, %s68
      %p77 = scmp.eq.s32.totalorder %s15, 0
      %p78 = por %p76, %p77
      %p79 = scmp.ne.s32.totalorder %s67, %s68
      %p80 = scmp.eq.s32.totalorder %s16, 1
      %p81 = por %p79, %p80
      %p83 = scmp.ne.s32.totalorder %s68, %s82
      %p84 = scmp.eq.s32.totalorder %s16, 0
      %p85 = por %p83, %p84
      %s86 = ssub.s32 %s10, %s17
      %p87 = scmp.eq.s32.totalorder %s86, 0
      %s89 = sadd.s32 %s88, 1
      %s90 = scalar_select %p87, %s88, %s89
      %p93 = pneg %p87
      %p94 = scmp.eq.s32.totalorder %s10, 1
      %p95 = por %p93, %p94
      %p96 = scmp.ne.s32.totalorder %s88, %s91
      %p97 = scmp.eq.s32.totalorder %s10, 0
      %p98 = por %p96, %p97
      %p99 = scmp.ne.s32.totalorder %s88, %s91
      %p100 = scmp.eq.s32.totalorder %s15, 1
      %p101 = por %p99, %p100
      %p102 = scmp.ne.s32.totalorder %s91, %s92
      %p103 = scmp.eq.s32.totalorder %s15, 0
      %p104 = por %p102, %p103
      %p105 = scmp.ne.s32.totalorder %s91, %s92
      %p106 = scmp.eq.s32.totalorder %s16, 1
      %p107 = por %p105, %p106
      %p109 = scmp.ne.s32.totalorder %s92, %s108
      %p110 = scmp.eq.s32.totalorder %s16, 0
      %p111 = por %p109, %p110
      %p112 = scmp.le.s32.totalorder 1, %s10
      %p113 = scmp.lt.s32.totalorder %s10, 3
      %p114 = pnand %p112, %p113
      %p115 = pneg %p114
      // Predicated region
      $region9: #{mlp_forward.1} parent=5 // pred_check
        _
      $region10: #{mlp_forward.1} parent=5 // pred_check_branch
        %117 = sbr.rel (%p114) target = $region12
      $region11: #{mlp_forward.1} parent=5 // pred_region
        %s118 = ssub.s32 %s10, 1
        // Predicated region
        $region13: #{mlp_forward.1} parent=11 // pred_check
          %p119 = pneg %p57
        $region14: #{mlp_forward.1} parent=11 // pred_check_branch
          %121 = sbr.rel (%p119) target = $region16
        $region15: #{mlp_forward.1} parent=11 // pred_region
          %s123 = ssub.s32 6272, 6272
          %124 = vsyncadd [#allocation3], %s123
          %s125 = sshll.u32 [#allocation2], 4
          %s126 = int_to_ptr.vmem [resolvable:$true] %s125
          %131 = dma.hbm_to_vmem [thread:$0]  %s1, 6272, %s126, [#allocation3], 64, 64, 4
        $region16: #{mlp_forward.1} parent=11 // pred_fallthru
          _
        // Predicated region
        $region17: #{mlp_forward.1} parent=11 // pred_check
          %p132 = pneg %p78
        $region18: #{mlp_forward.1} parent=11 // pred_check_branch
          %134 = sbr.rel (%p132) target = $region20
        $region19: #{mlp_forward.1} parent=11 // pred_region
          _
        $region20: #{mlp_forward.1} parent=11 // pred_fallthru
          _
      $region12: #{mlp_forward.1} parent=5 // pred_fallthru
        _
      %p135 = scmp.lt.s32.totalorder %s10, 2
      // Predicated region
      $region21: #{mlp_forward.1} parent=5 // pred_check
        %p136 = pneg %p135
      $region22: #{mlp_forward.1} parent=5 // pred_check_branch
        %138 = sbr.rel (%p136) target = $region24
      $region23: #{mlp_forward.1} parent=5 // pred_region
        // Predicated region
        $region25: #{mlp_forward.1} parent=23 // pred_check
          %p139 = pneg %p30
        $region26: #{mlp_forward.1} parent=23 // pred_check_branch
          %141 = sbr.rel (%p139) target = $region28
        $region27: #{mlp_forward.1} parent=23 // pred_region
          %p142 = scmp.lt.s32.totalorder %s10, 1
          %s143 = scalar_select %p142, %s10, 1
          %s144 = smul.addr %s143, 8
          %s145 = scalar_lea.vmem %s0, %s144
        $region28: #{mlp_forward.1} parent=23 // pred_fallthru
          _
      $region24: #{mlp_forward.1} parent=5 // pred_fallthru
        _
      %p146 = scmp.le.s32.totalorder 1, %s10
      %p147 = scmp.lt.s32.totalorder %s10, 3
      %p148 = pnand %p146, %p147
      %p149 = pneg %p148
      // Predicated region
      $region29: #{mlp_forward.1} parent=5 // pred_check
        _
      $region30: #{mlp_forward.1} parent=5 // pred_check_branch
        %151 = sbr.rel (%p148) target = $region32
      $region31: #{mlp_forward.1} parent=5 // pred_region
        %s152 = ssub.s32 %s10, 1
        // Predicated region
        $region33: #{mlp_forward.1} parent=31 // pred_check
          %p153 = pneg %p57
        $region34: #{mlp_forward.1} parent=31 // pred_check_branch
          %155 = sbr.rel (%p153) target = $region36
        $region35: #{mlp_forward.1} parent=31 // pred_region
          %156 = dma.done [#allocation3], 6272
        $region36: #{mlp_forward.1} parent=31 // pred_fallthru
          _
        %p157 = scmp.lt.s32.totalorder %s15, 1
        %s158 = scalar_select %p157, %s15, 1
        %s159 = smul.addr %s158, 8
        %s160 = scalar_lea.vmem %s0, %s159
        %p161 = pneg %p36
        %p162 = pneg %p33
        %p163 = pneg %p57
        %p164 = pneg %p54
        %p165 = pneg %p78
        %p166 = pneg %p75
        %p167 = pneg %p104
        %p168 = pneg %p101
        %p169 = scmp.lt.s32.totalorder %s15, 1
        %s170 = scalar_select %p169, %s15, 1
        %s171 = scalar_lea.vmem %s3, %s170
        %p172 = scmp.lt.s32.totalorder %s15, 1
        %s173 = scalar_select %p172, %s15, 1
        %s174 = smul.addr %s173, 8
        %s175 = scalar_lea.vmem %s0, %s174
        %p176 = scmp.lt.s32.totalorder %s15, 1
        %s177 = scalar_select %p176, %s15, 1
        %s178 = scalar_lea.vmem %s3, %s177
        %v180 = vld [vmem:[%s2] sm:$0xff]
        %v181 = vld [vmem:[%s2 + $0x8] sm:$0xff]
        %v182 = vld [vmem:[%s2 + $0x10] sm:$0xff]
        %v183 = vld [vmem:[%s2 + $0x18] sm:$0xff]
        %v184 = vld [vmem:[%s2 + $0x20] sm:$0xff]
        %v185 = vld [vmem:[%s2 + $0x28] sm:$0xff]
        %v186 = vld [vmem:[%s2 + $0x30] sm:$0xff]
        %v187 = vld [vmem:[%s2 + $0x38] sm:$0xff]
        %v188 = vld [vmem:[%s2 + $0x40] sm:$0xff]
        %v189 = vld [vmem:[%s2 + $0x48] sm:$0xff]
        %v190 = vld [vmem:[%s2 + $0x50] sm:$0xff]
        %v191 = vld [vmem:[%s2 + $0x58] sm:$0xff]
        %v192 = vld [vmem:[%s2 + $0x60] sm:$0xff]
        %v193 = vld [vmem:[%s2 + $0x68] sm:$0xff]
        %v194 = vld [vmem:[%s2 + $0x70] sm:$0xff]
        %v195 = vld [vmem:[%s2 + $0x78] sm:$0xff]
        %197 = vset.pattern.permute.xlu0 5
        %198 = vperm.xlu0 %197, %v180
        %v199 = vpop.permute.xlu0 %198
        %202 = vset.pattern.permute.xlu0 5
        %203 = vperm.xlu0 %202, %v181
        %v204 = vpop.permute.xlu0 %203
        %207 = vset.pattern.permute.xlu0 5
        %208 = vperm.xlu0 %207, %v182
        %v209 = vpop.permute.xlu0 %208
        %212 = vset.pattern.permute.xlu0 5
        %213 = vperm.xlu0 %212, %v183
        %v214 = vpop.permute.xlu0 %213
        %217 = vset.pattern.permute.xlu0 5
        %218 = vperm.xlu0 %217, %v184
        %v219 = vpop.permute.xlu0 %218
        %222 = vset.pattern.permute.xlu0 5
        %223 = vperm.xlu0 %222, %v185
        %v224 = vpop.permute.xlu0 %223
        %227 = vset.pattern.permute.xlu0 5
        %228 = vperm.xlu0 %227, %v186
        %v229 = vpop.permute.xlu0 %228
        %232 = vset.pattern.permute.xlu0 5
        %233 = vperm.xlu0 %232, %v187
        %v234 = vpop.permute.xlu0 %233
        %237 = vset.pattern.permute.xlu0 5
        %238 = vperm.xlu0 %237, %v188
        %v239 = vpop.permute.xlu0 %238
        %242 = vset.pattern.permute.xlu0 5
        %243 = vperm.xlu0 %242, %v189
        %v244 = vpop.permute.xlu0 %243
        %247 = vset.pattern.permute.xlu0 5
        %248 = vperm.xlu0 %247, %v190
        %v249 = vpop.permute.xlu0 %248
        %252 = vset.pattern.permute.xlu0 5
        %253 = vperm.xlu0 %252, %v191
        %v254 = vpop.permute.xlu0 %253
        %257 = vset.pattern.permute.xlu0 5
        %258 = vperm.xlu0 %257, %v192
        %v259 = vpop.permute.xlu0 %258
        %262 = vset.pattern.permute.xlu0 5
        %263 = vperm.xlu0 %262, %v193
        %v264 = vpop.permute.xlu0 %263
        %267 = vset.pattern.permute.xlu0 5
        %268 = vperm.xlu0 %267, %v194
        %v269 = vpop.permute.xlu0 %268
        %272 = vset.pattern.permute.xlu0 5
        %273 = vperm.xlu0 %272, %v195
        %v274 = vpop.permute.xlu0 %273
        %v276 = vld [vmem:[%s175] sm:$0x1]
        %277 = vset.pattern.permute.xlu0 0
        %278 = vperm.xlu0 %277, %v180
        %v279 = vpop.permute.xlu0 %278
        %281 = vset.pattern.permute.xlu0 0
        %282 = vperm.xlu0 %281, %v181
        %v283 = vpop.permute.xlu0 %282
        %285 = vset.pattern.permute.xlu0 0
        %286 = vperm.xlu0 %285, %v182
        %v287 = vpop.permute.xlu0 %286
        %289 = vset.pattern.permute.xlu0 0
        %290 = vperm.xlu0 %289, %v183
        %v291 = vpop.permute.xlu0 %290
        %293 = vset.pattern.permute.xlu0 0
        %294 = vperm.xlu0 %293, %v184
        %v295 = vpop.permute.xlu0 %294
        %297 = vset.pattern.permute.xlu0 0
        %298 = vperm.xlu0 %297, %v185
        %v299 = vpop.permute.xlu0 %298
        %301 = vset.pattern.permute.xlu0 0
        %302 = vperm.xlu0 %301, %v186
        %v303 = vpop.permute.xlu0 %302
        %305 = vset.pattern.permute.xlu0 0
        %306 = vperm.xlu0 %305, %v187
        %v307 = vpop.permute.xlu0 %306
        %309 = vset.pattern.permute.xlu0 0
        %310 = vperm.xlu0 %309, %v188
        %v311 = vpop.permute.xlu0 %310
        %313 = vset.pattern.permute.xlu0 0
        %314 = vperm.xlu0 %313, %v189
        %v315 = vpop.permute.xlu0 %314
        %317 = vset.pattern.permute.xlu0 0
        %318 = vperm.xlu0 %317, %v190
        %v319 = vpop.permute.xlu0 %318
        %321 = vset.pattern.permute.xlu0 0
        %322 = vperm.xlu0 %321, %v191
        %v323 = vpop.permute.xlu0 %322
        %325 = vset.pattern.permute.xlu0 0
        %326 = vperm.xlu0 %325, %v192
        %v327 = vpop.permute.xlu0 %326
        %329 = vset.pattern.permute.xlu0 0
        %330 = vperm.xlu0 %329, %v193
        %v331 = vpop.permute.xlu0 %330
        %333 = vset.pattern.permute.xlu0 0
        %334 = vperm.xlu0 %333, %v194
        %v335 = vpop.permute.xlu0 %334
        %337 = vset.pattern.permute.xlu0 0
        %338 = vperm.xlu0 %337, %v195
        %v339 = vpop.permute.xlu0 %338
        %v341 = vlaneseq
        %v342 = vshrl.u32 %v341, 7
        %v343 = vsub.s32 0, %v342
        %v344 = vrot.slane %v276, %v343
        %v345 = vmul.f32 %v279, %v344
        %v346 = vmul.f32 %v283, %v344
        %v347 = vmul.f32 %v287, %v344
        %v348 = vmul.f32 %v291, %v344
        %v349 = vmul.f32 %v295, %v344
        %v350 = vmul.f32 %v299, %v344
        %v351 = vmul.f32 %v303, %v344
        %v352 = vmul.f32 %v307, %v344
        %v353 = vmul.f32 %v311, %v344
        %v354 = vmul.f32 %v315, %v344
        %v355 = vmul.f32 %v319, %v344
        %v356 = vmul.f32 %v323, %v344
        %v357 = vmul.f32 %v327, %v344
        %v358 = vmul.f32 %v331, %v344
        %v359 = vmul.f32 %v335, %v344
        %v360 = vmul.f32 %v339, %v344
        %v361 = vadd.f32 %v199, %v345
        %v362 = vadd.f32 %v204, %v346
        %v363 = vadd.f32 %v209, %v347
        %v364 = vadd.f32 %v214, %v348
        %v365 = vadd.f32 %v219, %v349
        %v366 = vadd.f32 %v224, %v350
        %v367 = vadd.f32 %v229, %v351
        %v368 = vadd.f32 %v234, %v352
        %v369 = vadd.f32 %v239, %v353
        %v370 = vadd.f32 %v244, %v354
        %v371 = vadd.f32 %v249, %v355
        %v372 = vadd.f32 %v254, %v356
        %v373 = vadd.f32 %v259, %v357
        %v374 = vadd.f32 %v264, %v358
        %v375 = vadd.f32 %v269, %v359
        %v376 = vadd.f32 %v274, %v360
        %v377 = vld [vmem:[%s175 + $0x1] sm:$0x1]
        %378 = vset.pattern.permute.xlu0 1
        %379 = vperm.xlu0 %378, %v180
        %v380 = vpop.permute.xlu0 %379
        %382 = vset.pattern.permute.xlu0 1
        %383 = vperm.xlu0 %382, %v181
        %v384 = vpop.permute.xlu0 %383
        %386 = vset.pattern.permute.xlu0 1
        %387 = vperm.xlu0 %386, %v182
        %v388 = vpop.permute.xlu0 %387
        %390 = vset.pattern.permute.xlu0 1
        %391 = vperm.xlu0 %390, %v183
        %v392 = vpop.permute.xlu0 %391
        %394 = vset.pattern.permute.xlu0 1
        %395 = vperm.xlu0 %394, %v184
        %v396 = vpop.permute.xlu0 %395
        %398 = vset.pattern.permute.xlu0 1
        %399 = vperm.xlu0 %398, %v185
        %v400 = vpop.permute.xlu0 %399
        %402 = vset.pattern.permute.xlu0 1
        %403 = vperm.xlu0 %402, %v186
        %v404 = vpop.permute.xlu0 %403
        %406 = vset.pattern.permute.xlu0 1
        %407 = vperm.xlu0 %406, %v187
        %v408 = vpop.permute.xlu0 %407
        %410 = vset.pattern.permute.xlu0 1
        %411 = vperm.xlu0 %410, %v188
        %v412 = vpop.permute.xlu0 %411
        %414 = vset.pattern.permute.xlu0 1
        %415 = vperm.xlu0 %414, %v189
        %v416 = vpop.permute.xlu0 %415
        %418 = vset.pattern.permute.xlu0 1
        %419 = vperm.xlu0 %418, %v190
        %v420 = vpop.permute.xlu0 %419
        %422 = vset.pattern.permute.xlu0 1
        %423 = vperm.xlu0 %422, %v191
        %v424 = vpop.permute.xlu0 %423
        %426 = vset.pattern.permute.xlu0 1
        %427 = vperm.xlu0 %426, %v192
        %v428 = vpop.permute.xlu0 %427
        %430 = vset.pattern.permute.xlu0 1
        %431 = vperm.xlu0 %430, %v193
        %v432 = vpop.permute.xlu0 %431
        %434 = vset.pattern.permute.xlu0 1
        %435 = vperm.xlu0 %434, %v194
        %v436 = vpop.permute.xlu0 %435
        %438 = vset.pattern.permute.xlu0 1
        %439 = vperm.xlu0 %438, %v195
        %v440 = vpop.permute.xlu0 %439
        %v442 = vlaneseq
        %v443 = vshrl.u32 %v442, 7
        %v444 = vsub.s32 0, %v443
        %v445 = vrot.slane %v377, %v444
        %v446 = vmul.f32 %v380, %v445
        %v447 = vmul.f32 %v384, %v445
        %v448 = vmul.f32 %v388, %v445
        %v449 = vmul.f32 %v392, %v445
        %v450 = vmul.f32 %v396, %v445
        %v451 = vmul.f32 %v400, %v445
        %v452 = vmul.f32 %v404, %v445
        %v453 = vmul.f32 %v408, %v445
        %v454 = vmul.f32 %v412, %v445
        %v455 = vmul.f32 %v416, %v445
        %v456 = vmul.f32 %v420, %v445
        %v457 = vmul.f32 %v424, %v445
        %v458 = vmul.f32 %v428, %v445
        %v459 = vmul.f32 %v432, %v445
        %v460 = vmul.f32 %v436, %v445
        %v461 = vmul.f32 %v440, %v445
        %v462 = vadd.f32 %v361, %v446
        %v463 = vadd.f32 %v362, %v447
        %v464 = vadd.f32 %v363, %v448
        %v465 = vadd.f32 %v364, %v449
        %v466 = vadd.f32 %v365, %v450
        %v467 = vadd.f32 %v366, %v451
        %v468 = vadd.f32 %v367, %v452
        %v469 = vadd.f32 %v368, %v453
        %v470 = vadd.f32 %v369, %v454
        %v471 = vadd.f32 %v370, %v455
        %v472 = vadd.f32 %v371, %v456
        %v473 = vadd.f32 %v372, %v457
        %v474 = vadd.f32 %v373, %v458
        %v475 = vadd.f32 %v374, %v459
        %v476 = vadd.f32 %v375, %v460
        %v477 = vadd.f32 %v376, %v461
        %v478 = vld [vmem:[%s175 + $0x2] sm:$0x1]
        %479 = vset.pattern.permute.xlu0 2
        %480 = vperm.xlu0 %479, %v180
        %v481 = vpop.permute.xlu0 %480
        %483 = vset.pattern.permute.xlu0 2
        %484 = vperm.xlu0 %483, %v181
        %v485 = vpop.permute.xlu0 %484
        %487 = vset.pattern.permute.xlu0 2
        %488 = vperm.xlu0 %487, %v182
        %v489 = vpop.permute.xlu0 %488
        %491 = vset.pattern.permute.xlu0 2
        %492 = vperm.xlu0 %491, %v183
        %v493 = vpop.permute.xlu0 %492
        %495 = vset.pattern.permute.xlu0 2
        %496 = vperm.xlu0 %495, %v184
        %v497 = vpop.permute.xlu0 %496
        %499 = vset.pattern.permute.xlu0 2
        %500 = vperm.xlu0 %499, %v185
        %v501 = vpop.permute.xlu0 %500
        %503 = vset.pattern.permute.xlu0 2
        %504 = vperm.xlu0 %503, %v186
        %v505 = vpop.permute.xlu0 %504
        %507 = vset.pattern.permute.xlu0 2
        %508 = vperm.xlu0 %507, %v187
        %v509 = vpop.permute.xlu0 %508
        %511 = vset.pattern.permute.xlu0 2
        %512 = vperm.xlu0 %511, %v188
        %v513 = vpop.permute.xlu0 %512
        %515 = vset.pattern.permute.xlu0 2
        %516 = vperm.xlu0 %515, %v189
        %v517 = vpop.permute.xlu0 %516
        %519 = vset.pattern.permute.xlu0 2
        %520 = vperm.xlu0 %519, %v190
        %v521 = vpop.permute.xlu0 %520
        %523 = vset.pattern.permute.xlu0 2
        %524 = vperm.xlu0 %523, %v191
        %v525 = vpop.permute.xlu0 %524
        %527 = vset.pattern.permute.xlu0 2
        %528 = vperm.xlu0 %527, %v192
        %v529 = vpop.permute.xlu0 %528
        %531 = vset.pattern.permute.xlu0 2
        %532 = vperm.xlu0 %531, %v193
        %v533 = vpop.permute.xlu0 %532
        %535 = vset.pattern.permute.xlu0 2
        %536 = vperm.xlu0 %535, %v194
        %v537 = vpop.permute.xlu0 %536
        %539 = vset.pattern.permute.xlu0 2
        %540 = vperm.xlu0 %539, %v195
        %v541 = vpop.permute.xlu0 %540
        %v543 = vlaneseq
        %v544 = vshrl.u32 %v543, 7
        %v545 = vsub.s32 0, %v544
        %v546 = vrot.slane %v478, %v545
        %v547 = vmul.f32 %v481, %v546
        %v548 = vmul.f32 %v485, %v546
        %v549 = vmul.f32 %v489, %v546
        %v550 = vmul.f32 %v493, %v546
        %v551 = vmul.f32 %v497, %v546
        %v552 = vmul.f32 %v501, %v546
        %v553 = vmul.f32 %v505, %v546
        %v554 = vmul.f32 %v509, %v546
        %v555 = vmul.f32 %v513, %v546
        %v556 = vmul.f32 %v517, %v546
        %v557 = vmul.f32 %v521, %v546
        %v558 = vmul.f32 %v525, %v546
        %v559 = vmul.f32 %v529, %v546
        %v560 = vmul.f32 %v533, %v546
        %v561 = vmul.f32 %v537, %v546
        %v562 = vmul.f32 %v541, %v546
        %v563 = vadd.f32 %v462, %v547
        %v564 = vadd.f32 %v463, %v548
        %v565 = vadd.f32 %v464, %v549
        %v566 = vadd.f32 %v465, %v550
        %v567 = vadd.f32 %v466, %v551
        %v568 = vadd.f32 %v467, %v552
        %v569 = vadd.f32 %v468, %v553
        %v570 = vadd.f32 %v469, %v554
        %v571 = vadd.f32 %v470, %v555
        %v572 = vadd.f32 %v471, %v556
        %v573 = vadd.f32 %v472, %v557
        %v574 = vadd.f32 %v473, %v558
        %v575 = vadd.f32 %v474, %v559
        %v576 = vadd.f32 %v475, %v560
        %v577 = vadd.f32 %v476, %v561
        %v578 = vadd.f32 %v477, %v562
        %v579 = vld [vmem:[%s175 + $0x3] sm:$0x1]
        %580 = vset.pattern.permute.xlu0 3
        %581 = vperm.xlu0 %580, %v180
        %v582 = vpop.permute.xlu0 %581
        %584 = vset.pattern.permute.xlu0 3
        %585 = vperm.xlu0 %584, %v181
        %v586 = vpop.permute.xlu0 %585
        %588 = vset.pattern.permute.xlu0 3
        %589 = vperm.xlu0 %588, %v182
        %v590 = vpop.permute.xlu0 %589
        %592 = vset.pattern.permute.xlu0 3
        %593 = vperm.xlu0 %592, %v183
        %v594 = vpop.permute.xlu0 %593
        %596 = vset.pattern.permute.xlu0 3
        %597 = vperm.xlu0 %596, %v184
        %v598 = vpop.permute.xlu0 %597
        %600 = vset.pattern.permute.xlu0 3
        %601 = vperm.xlu0 %600, %v185
        %v602 = vpop.permute.xlu0 %601
        %604 = vset.pattern.permute.xlu0 3
        %605 = vperm.xlu0 %604, %v186
        %v606 = vpop.permute.xlu0 %605
        %608 = vset.pattern.permute.xlu0 3
        %609 = vperm.xlu0 %608, %v187
        %v610 = vpop.permute.xlu0 %609
        %612 = vset.pattern.permute.xlu0 3
        %613 = vperm.xlu0 %612, %v188
        %v614 = vpop.permute.xlu0 %613
        %616 = vset.pattern.permute.xlu0 3
        %617 = vperm.xlu0 %616, %v189
        %v618 = vpop.permute.xlu0 %617
        %620 = vset.pattern.permute.xlu0 3
        %621 = vperm.xlu0 %620, %v190
        %v622 = vpop.permute.xlu0 %621
        %624 = vset.pattern.permute.xlu0 3
        %625 = vperm.xlu0 %624, %v191
        %v626 = vpop.permute.xlu0 %625
        %628 = vset.pattern.permute.xlu0 3
        %629 = vperm.xlu0 %628, %v192
        %v630 = vpop.permute.xlu0 %629
        %632 = vset.pattern.permute.xlu0 3
        %633 = vperm.xlu0 %632, %v193
        %v634 = vpop.permute.xlu0 %633
        %636 = vset.pattern.permute.xlu0 3
        %637 = vperm.xlu0 %636, %v194
        %v638 = vpop.permute.xlu0 %637
        %640 = vset.pattern.permute.xlu0 3
        %641 = vperm.xlu0 %640, %v195
        %v642 = vpop.permute.xlu0 %641
        %v644 = vlaneseq
        %v645 = vshrl.u32 %v644, 7
        %v646 = vsub.s32 0, %v645
        %v647 = vrot.slane %v579, %v646
        %v648 = vmul.f32 %v582, %v647
        %v649 = vmul.f32 %v586, %v647
        %v650 = vmul.f32 %v590, %v647
        %v651 = vmul.f32 %v594, %v647
        %v652 = vmul.f32 %v598, %v647
        %v653 = vmul.f32 %v602, %v647
        %v654 = vmul.f32 %v606, %v647
        %v655 = vmul.f32 %v610, %v647
        %v656 = vmul.f32 %v614, %v647
        %v657 = vmul.f32 %v618, %v647
        %v658 = vmul.f32 %v622, %v647
        %v659 = vmul.f32 %v626, %v647
        %v660 = vmul.f32 %v630, %v647
        %v661 = vmul.f32 %v634, %v647
        %v662 = vmul.f32 %v638, %v647
        %v663 = vmul.f32 %v642, %v647
        %v664 = vadd.f32 %v563, %v648
        %v665 = vadd.f32 %v564, %v649
        %v666 = vadd.f32 %v565, %v650
        %v667 = vadd.f32 %v566, %v651
        %v668 = vadd.f32 %v567, %v652
        %v669 = vadd.f32 %v568, %v653
        %v670 = vadd.f32 %v569, %v654
        %v671 = vadd.f32 %v570, %v655
        %v672 = vadd.f32 %v571, %v656
        %v673 = vadd.f32 %v572, %v657
        %v674 = vadd.f32 %v573, %v658
        %v675 = vadd.f32 %v574, %v659
        %v676 = vadd.f32 %v575, %v660
        %v677 = vadd.f32 %v576, %v661
        %v678 = vadd.f32 %v577, %v662
        %v679 = vadd.f32 %v578, %v663
        %v680 = vld [vmem:[%s175 + $0x4] sm:$0x1]
        %681 = vset.pattern.permute.xlu0 4
        %682 = vperm.xlu0 %681, %v180
        %v683 = vpop.permute.xlu0 %682
        %685 = vset.pattern.permute.xlu0 4
        %686 = vperm.xlu0 %685, %v181
        %v687 = vpop.permute.xlu0 %686
        %689 = vset.pattern.permute.xlu0 4
        %690 = vperm.xlu0 %689, %v182
        %v691 = vpop.permute.xlu0 %690
        %693 = vset.pattern.permute.xlu0 4
        %694 = vperm.xlu0 %693, %v183
        %v695 = vpop.permute.xlu0 %694
        %697 = vset.pattern.permute.xlu0 4
        %698 = vperm.xlu0 %697, %v184
        %v699 = vpop.permute.xlu0 %698
        %701 = vset.pattern.permute.xlu0 4
        %702 = vperm.xlu0 %701, %v185
        %v703 = vpop.permute.xlu0 %702
        %705 = vset.pattern.permute.xlu0 4
        %706 = vperm.xlu0 %705, %v186
        %v707 = vpop.permute.xlu0 %706
        %709 = vset.pattern.permute.xlu0 4
        %710 = vperm.xlu0 %709, %v187
        %v711 = vpop.permute.xlu0 %710
        %713 = vset.pattern.permute.xlu0 4
        %714 = vperm.xlu0 %713, %v188
        %v715 = vpop.permute.xlu0 %714
        %717 = vset.pattern.permute.xlu0 4
        %718 = vperm.xlu0 %717, %v189
        %v719 = vpop.permute.xlu0 %718
        %721 = vset.pattern.permute.xlu0 4
        %722 = vperm.xlu0 %721, %v190
        %v723 = vpop.permute.xlu0 %722
        %725 = vset.pattern.permute.xlu0 4
        %726 = vperm.xlu0 %725, %v191
        %v727 = vpop.permute.xlu0 %726
        %729 = vset.pattern.permute.xlu0 4
        %730 = vperm.xlu0 %729, %v192
        %v731 = vpop.permute.xlu0 %730
        %733 = vset.pattern.permute.xlu0 4
        %734 = vperm.xlu0 %733, %v193
        %v735 = vpop.permute.xlu0 %734
        %737 = vset.pattern.permute.xlu0 4
        %738 = vperm.xlu0 %737, %v194
        %v739 = vpop.permute.xlu0 %738
        %741 = vset.pattern.permute.xlu0 4
        %742 = vperm.xlu0 %741, %v195
        %v743 = vpop.permute.xlu0 %742
        %v745 = vlaneseq
        %v746 = vshrl.u32 %v745, 7
        %v747 = vsub.s32 0, %v746
        %v748 = vrot.slane %v680, %v747
        %v749 = vmul.f32 %v683, %v748
        %v750 = vmul.f32 %v687, %v748
        %v751 = vmul.f32 %v691, %v748
        %v752 = vmul.f32 %v695, %v748
        %v753 = vmul.f32 %v699, %v748
        %v754 = vmul.f32 %v703, %v748
        %v755 = vmul.f32 %v707, %v748
        %v756 = vmul.f32 %v711, %v748
        %v757 = vmul.f32 %v715, %v748
        %v758 = vmul.f32 %v719, %v748
        %v759 = vmul.f32 %v723, %v748
        %v760 = vmul.f32 %v727, %v748
        %v761 = vmul.f32 %v731, %v748
        %v762 = vmul.f32 %v735, %v748
        %v763 = vmul.f32 %v739, %v748
        %v764 = vmul.f32 %v743, %v748
        %v765 = vadd.f32 %v664, %v749
        %v766 = vadd.f32 %v665, %v750
        %v767 = vadd.f32 %v666, %v751
        %v768 = vadd.f32 %v667, %v752
        %v769 = vadd.f32 %v668, %v753
        %v770 = vadd.f32 %v669, %v754
        %v771 = vadd.f32 %v670, %v755
        %v772 = vadd.f32 %v671, %v756
        %v773 = vadd.f32 %v672, %v757
        %v774 = vadd.f32 %v673, %v758
        %v775 = vadd.f32 %v674, %v759
        %v776 = vadd.f32 %v675, %v760
        %v777 = vadd.f32 %v676, %v761
        %v778 = vadd.f32 %v677, %v762
        %v779 = vadd.f32 %v678, %v763
        %v780 = vadd.f32 %v679, %v764
        %v781 = vmul.f32 %v765, 0.01
        %v782 = vmul.f32 %v766, 0.01
        %v783 = vmul.f32 %v767, 0.01
        %v784 = vmul.f32 %v768, 0.01
        %v785 = vmul.f32 %v769, 0.01
        %v786 = vmul.f32 %v770, 0.01
        %v787 = vmul.f32 %v771, 0.01
        %v788 = vmul.f32 %v772, 0.01
        %v789 = vmul.f32 %v773, 0.01
        %v790 = vmul.f32 %v774, 0.01
        %v791 = vmul.f32 %v775, 0.01
        %v792 = vmul.f32 %v776, 0.01
        %v793 = vmul.f32 %v777, 0.01
        %v794 = vmul.f32 %v778, 0.01
        %v795 = vmul.f32 %v779, 0.01
        %v796 = vmul.f32 %v780, 0.01
        %v797 = vmax.f32 %v765, %v781
        %v798 = vmax.f32 %v766, %v782
        %v799 = vmax.f32 %v767, %v783
        %v800 = vmax.f32 %v768, %v784
        %v801 = vmax.f32 %v769, %v785
        %v802 = vmax.f32 %v770, %v786
        %v803 = vmax.f32 %v771, %v787
        %v804 = vmax.f32 %v772, %v788
        %v805 = vmax.f32 %v773, %v789
        %v806 = vmax.f32 %v774, %v790
        %v807 = vmax.f32 %v775, %v791
        %v808 = vmax.f32 %v776, %v792
        %v809 = vmax.f32 %v777, %v793
        %v810 = vmax.f32 %v778, %v794
        %v811 = vmax.f32 %v779, %v795
        %v812 = vmax.f32 %v780, %v796
        %v813 = vld [vmem:[#allocation2] sm:$0xf]
        %v814 = vld [vmem:[#allocation2 + $0x4] sm:$0xf]
        %v815 = vld [vmem:[#allocation2 + $0x8] sm:$0xf]
        %v816 = vld [vmem:[#allocation2 + $0xc] sm:$0xf]
        %v817 = vld [vmem:[#allocation2 + $0x10] sm:$0xf]
        %v818 = vld [vmem:[#allocation2 + $0x14] sm:$0xf]
        %v819 = vld [vmem:[#allocation2 + $0x18] sm:$0xf]
        %v820 = vld [vmem:[#allocation2 + $0x1c] sm:$0xf]
        %v821 = vld [vmem:[#allocation2 + $0x20] sm:$0xf]
        %v822 = vld [vmem:[#allocation2 + $0x24] sm:$0xf]
        %v823 = vld [vmem:[#allocation2 + $0x28] sm:$0xf]
        %v824 = vld [vmem:[#allocation2 + $0x2c] sm:$0xf]
        %v825 = vld [vmem:[#allocation2 + $0x30] sm:$0xf]
        %v826 = vld [vmem:[#allocation2 + $0x34] sm:$0xf]
        %v827 = vld [vmem:[#allocation2 + $0x38] sm:$0xf]
        %v828 = vld [vmem:[#allocation2 + $0x3c] sm:$0xf]
        %v829 = vpack.c.bf16 %v798, %v797
        %v830 = vpack.c.bf16 %v800, %v799
        %v831 = vpack.c.bf16 %v802, %v801
        %v832 = vpack.c.bf16 %v804, %v803
        %v833 = vpack.c.bf16 %v806, %v805
        %v834 = vpack.c.bf16 %v808, %v807
        %v835 = vpack.c.bf16 %v810, %v809
        %v836 = vpack.c.bf16 %v812, %v811
        %837 = vset.pattern.permute.xlu0 6
        %838 = vperm.xlu0 %837, %v180
        %v839 = vpop.permute.xlu0 %838
        %841 = vset.pattern.permute.xlu0 6
        %842 = vperm.xlu0 %841, %v181
        %v843 = vpop.permute.xlu0 %842
        %845 = vset.pattern.permute.xlu0 6
        %846 = vperm.xlu0 %845, %v182
        %v847 = vpop.permute.xlu0 %846
        %849 = vset.pattern.permute.xlu0 6
        %850 = vperm.xlu0 %849, %v183
        %v851 = vpop.permute.xlu0 %850
        %853 = vset.pattern.permute.xlu0 6
        %854 = vperm.xlu0 %853, %v184
        %v855 = vpop.permute.xlu0 %854
        %857 = vset.pattern.permute.xlu0 6
        %858 = vperm.xlu0 %857, %v185
        %v859 = vpop.permute.xlu0 %858
        %861 = vset.pattern.permute.xlu0 6
        %862 = vperm.xlu0 %861, %v186
        %v863 = vpop.permute.xlu0 %862
        %865 = vset.pattern.permute.xlu0 6
        %866 = vperm.xlu0 %865, %v187
        %v867 = vpop.permute.xlu0 %866
        %869 = vset.pattern.permute.xlu0 6
        %870 = vperm.xlu0 %869, %v188
        %v871 = vpop.permute.xlu0 %870
        %873 = vset.pattern.permute.xlu0 6
        %874 = vperm.xlu0 %873, %v189
        %v875 = vpop.permute.xlu0 %874
        %877 = vset.pattern.permute.xlu0 6
        %878 = vperm.xlu0 %877, %v190
        %v879 = vpop.permute.xlu0 %878
        %881 = vset.pattern.permute.xlu0 6
        %882 = vperm.xlu0 %881, %v191
        %v883 = vpop.permute.xlu0 %882
        %885 = vset.pattern.permute.xlu0 6
        %886 = vperm.xlu0 %885, %v192
        %v887 = vpop.permute.xlu0 %886
        %889 = vset.pattern.permute.xlu0 6
        %890 = vperm.xlu0 %889, %v193
        %v891 = vpop.permute.xlu0 %890
        %893 = vset.pattern.permute.xlu0 6
        %894 = vperm.xlu0 %893, %v194
        %v895 = vpop.permute.xlu0 %894
        %897 = vset.pattern.permute.xlu0 6
        %898 = vperm.xlu0 %897, %v195
        %v899 = vpop.permute.xlu0 %898
        %v917 = vunpack.c.l.b16 %v813
        %v918 = vunpack.c.l.b16 %v814
        %v919 = vunpack.c.l.b16 %v815
        %v920 = vunpack.c.l.b16 %v816
        %v921 = vunpack.c.l.b16 %v817
        %v922 = vunpack.c.l.b16 %v818
        %v923 = vunpack.c.l.b16 %v819
        %v924 = vunpack.c.l.b16 %v820
        %v925 = vunpack.c.l.b16 %v821
        %v926 = vunpack.c.l.b16 %v822
        %v927 = vunpack.c.l.b16 %v823
        %v928 = vunpack.c.l.b16 %v824
        %v929 = vunpack.c.l.b16 %v825
        %v930 = vunpack.c.l.b16 %v826
        %v931 = vunpack.c.l.b16 %v827
        %v932 = vunpack.c.l.b16 %v828
        %v933 = vpack.c.b16 %v918, %v917
        %v934 = vpack.c.b16 %v920, %v919
        %v935 = vpack.c.b16 %v922, %v921
        %v936 = vpack.c.b16 %v924, %v923
        %v937 = vpack.c.b16 %v926, %v925
        %v938 = vpack.c.b16 %v928, %v927
        %v939 = vpack.c.b16 %v930, %v929
        %v940 = vpack.c.b16 %v932, %v931
        %949 = vmatprep.subr.bf16.mxu0 0
        %950 = vmatpush1.bf16.msra.mxu0 %v829
        %951 = vmatprep.subr.bf16.mxu0 0
        %952 = vmatpush1.bf16.msra.mxu0 %v830
        %953 = vmatprep.subr.bf16.mxu0 0
        %954 = vmatpush1.bf16.msra.mxu0 %v831
        %955 = vmatprep.subr.bf16.mxu0 0
        %956 = vmatpush1.bf16.msra.mxu0 %v832
        %957 = vmatprep.subr.bf16.mxu0 0
        %958 = vmatpush1.bf16.msra.mxu0 %v833
        %959 = vmatprep.subr.bf16.mxu0 0
        %960 = vmatpush1.bf16.msra.mxu0 %v834
        %961 = vmatprep.subr.bf16.mxu0 0
        %962 = vmatpush1.bf16.msra.mxu0 %v835
        %963 = vmatprep.subr.bf16.mxu0 0
        %964 = vmatpush1.bf16.msra.mxu0 %v836
        %965 = vmatprep.subr.bf16.mxu0 0
        %966 = vmatpush1.bf16.msra.mxu0 0
        %967 = vmatprep.subr.bf16.mxu0 0
        %968 = vmatpush1.bf16.msra.mxu0 0
        %969 = vmatprep.subr.bf16.mxu0 0
        %970 = vmatpush1.bf16.msra.mxu0 0
        %971 = vmatprep.subr.bf16.mxu0 0
        %972 = vmatpush1.bf16.msra.mxu0 0
        %973 = vmatprep.subr.bf16.mxu0 0
        %974 = vmatpush1.bf16.msra.mxu0 0
        %975 = vmatprep.subr.bf16.mxu0 0
        %976 = vmatpush1.bf16.msra.mxu0 0
        %977 = vmatprep.subr.bf16.mxu0 0
        %978 = vmatpush1.bf16.msra.mxu0 0
        %979 = vmatprep.subr.bf16.mxu0 0
        %980 = vmatpush1.bf16.msra.mxu0 0
        %981 = vmatprep.mubr.bf16.mxu0 0
        %982 = vmatmul.mubr.bf16.gmra.mrb[0].mxu0 %v933
        %v983 = vpop.f32.mrb[0].mxu0
        %v984 = vadd.f32 %v839, %v983
        %v985 = vpop.f32.mrb[0].mxu0
        %v986 = vpop.f32.mrb[0].mxu0
        %v987 = vadd.f32 %v843, %v986
        %v988 = vpop.f32.mrb[0].mxu0
        %989 = vmatprep.mubr.bf16.mxu0 0
        %990 = vmatmul.mubr.bf16.gmra.mrb[0].mxu0 %v934
        %v991 = vpop.f32.mrb[0].mxu0
        %v992 = vadd.f32 %v847, %v991
        %v993 = vpop.f32.mrb[0].mxu0
        %v994 = vpop.f32.mrb[0].mxu0
        %v995 = vadd.f32 %v851, %v994
        %v996 = vpop.f32.mrb[0].mxu0
        %997 = vmatprep.mubr.bf16.mxu0 0
        %998 = vmatmul.mubr.bf16.gmra.mrb[0].mxu0 %v935
        %v999 = vpop.f32.mrb[0].mxu0
        %v1000 = vadd.f32 %v855, %v999
        %v1001 = vpop.f32.mrb[0].mxu0
        %v1002 = vpop.f32.mrb[0].mxu0
        %v1003 = vadd.f32 %v859, %v1002
        %v1004 = vpop.f32.mrb[0].mxu0
        %1005 = vmatprep.mubr.bf16.mxu0 0
        %1006 = vmatmul.mubr.bf16.gmra.mrb[0].mxu0 %v936
        %v1007 = vpop.f32.mrb[0].mxu0
        %v1008 = vadd.f32 %v863, %v1007
        %v1009 = vpop.f32.mrb[0].mxu0
        %v1010 = vpop.f32.mrb[0].mxu0
        %v1011 = vadd.f32 %v867, %v1010
        %v1012 = vpop.f32.mrb[0].mxu0
        %1013 = vmatprep.mubr.bf16.mxu0 0
        %1014 = vmatmul.mubr.bf16.gmra.mrb[0].mxu0 %v937
        %v1015 = vpop.f32.mrb[0].mxu0
        %v1016 = vadd.f32 %v871, %v1015
        %v1017 = vpop.f32.mrb[0].mxu0
        %v1018 = vpop.f32.mrb[0].mxu0
        %v1019 = vadd.f32 %v875, %v1018
        %v1020 = vpop.f32.mrb[0].mxu0
        %1021 = vmatprep.mubr.bf16.mxu0 0
        %1022 = vmatmul.mubr.bf16.gmra.mrb[0].mxu0 %v938
        %v1023 = vpop.f32.mrb[0].mxu0
        %v1024 = vadd.f32 %v879, %v1023
        %v1025 = vpop.f32.mrb[0].mxu0
        %v1026 = vpop.f32.mrb[0].mxu0
        %v1027 = vadd.f32 %v883, %v1026
        %v1028 = vpop.f32.mrb[0].mxu0
        %1029 = vmatprep.mubr.bf16.mxu0 0
        %1030 = vmatmul.mubr.bf16.gmra.mrb[0].mxu0 %v939
        %v1031 = vpop.f32.mrb[0].mxu0
        %v1032 = vadd.f32 %v887, %v1031
        %v1033 = vpop.f32.mrb[0].mxu0
        %v1034 = vpop.f32.mrb[0].mxu0
        %v1035 = vadd.f32 %v891, %v1034
        %v1036 = vpop.f32.mrb[0].mxu0
        %1037 = vmatprep.mubr.bf16.mxu0 0
        %1038 = vmatmul.mubr.bf16.gmra.mrb[0].mxu0 %v940
        %v1039 = vpop.f32.mrb[0].mxu0
        %v1040 = vadd.f32 %v895, %v1039
        %v1041 = vpop.f32.mrb[0].mxu0
        %v1042 = vpop.f32.mrb[0].mxu0
        %v1043 = vadd.f32 %v899, %v1042
        %v1044 = vpop.f32.mrb[0].mxu0
        %1045 = vdwg.mxu0
        %v1046 = vmul.f32 %v984, 0.01
        %v1047 = vmul.f32 %v987, 0.01
        %v1048 = vmul.f32 %v992, 0.01
        %v1049 = vmul.f32 %v995, 0.01
        %v1050 = vmul.f32 %v1000, 0.01
        %v1051 = vmul.f32 %v1003, 0.01
        %v1052 = vmul.f32 %v1008, 0.01
        %v1053 = vmul.f32 %v1011, 0.01
        %v1054 = vmul.f32 %v1016, 0.01
        %v1055 = vmul.f32 %v1019, 0.01
        %v1056 = vmul.f32 %v1024, 0.01
        %v1057 = vmul.f32 %v1027, 0.01
        %v1058 = vmul.f32 %v1032, 0.01
        %v1059 = vmul.f32 %v1035, 0.01
        %v1060 = vmul.f32 %v1040, 0.01
        %v1061 = vmul.f32 %v1043, 0.01
        %v1062 = vmax.f32 %v984, %v1046
        %v1063 = vmax.f32 %v987, %v1047
        %v1064 = vmax.f32 %v992, %v1048
        %v1065 = vmax.f32 %v995, %v1049
        %v1066 = vmax.f32 %v1000, %v1050
        %v1067 = vmax.f32 %v1003, %v1051
        %v1068 = vmax.f32 %v1008, %v1052
        %v1069 = vmax.f32 %v1011, %v1053
        %v1070 = vmax.f32 %v1016, %v1054
        %v1071 = vmax.f32 %v1019, %v1055
        %v1072 = vmax.f32 %v1024, %v1056
        %v1073 = vmax.f32 %v1027, %v1057
        %v1074 = vmax.f32 %v1032, %v1058
        %v1075 = vmax.f32 %v1035, %v1059
        %v1076 = vmax.f32 %v1040, %v1060
        %v1077 = vmax.f32 %v1043, %v1061
        %v1078 = vld [vmem:[#allocation2 + $0x40] sm:$0xf]
        %v1079 = vld [vmem:[#allocation2 + $0x44] sm:$0xf]
        %v1080 = vld [vmem:[#allocation2 + $0x48] sm:$0xf]
        %v1081 = vld [vmem:[#allocation2 + $0x4c] sm:$0xf]
        %v1082 = vld [vmem:[#allocation2 + $0x50] sm:$0xf]
        %v1083 = vld [vmem:[#allocation2 + $0x54] sm:$0xf]
        %v1084 = vld [vmem:[#allocation2 + $0x58] sm:$0xf]
        %v1085 = vld [vmem:[#allocation2 + $0x5c] sm:$0xf]
        %v1086 = vld [vmem:[#allocation2 + $0x60] sm:$0xf]
        %v1087 = vld [vmem:[#allocation2 + $0x64] sm:$0xf]
        %v1088 = vld [vmem:[#allocation2 + $0x68] sm:$0xf]
        %v1089 = vld [vmem:[#allocation2 + $0x6c] sm:$0xf]
        %v1090 = vld [vmem:[#allocation2 + $0x70] sm:$0xf]
        %v1091 = vld [vmem:[#allocation2 + $0x74] sm:$0xf]
        %v1092 = vld [vmem:[#allocation2 + $0x78] sm:$0xf]
        %v1093 = vld [vmem:[#allocation2 + $0x7c] sm:$0xf]
        %v1094 = vpack.c.bf16 %v1063, %v1062
        %v1095 = vpack.c.bf16 %v1065, %v1064
        %v1096 = vpack.c.bf16 %v1067, %v1066
        %v1097 = vpack.c.bf16 %v1069, %v1068
        %v1098 = vpack.c.bf16 %v1071, %v1070
        %v1099 = vpack.c.bf16 %v1073, %v1072
        %v1100 = vpack.c.bf16 %v1075, %v1074
        %v1101 = vpack.c.bf16 %v1077, %v1076
        %v1118 = vunpack.c.l.b16 %v1078
        %v1119 = vunpack.c.l.b16 %v1079
        %v1120 = vunpack.c.l.b16 %v1080
        %v1121 = vunpack.c.l.b16 %v1081
        %v1122 = vunpack.c.l.b16 %v1082
        %v1123 = vunpack.c.l.b16 %v1083
        %v1124 = vunpack.c.l.b16 %v1084
        %v1125 = vunpack.c.l.b16 %v1085
        %v1126 = vunpack.c.l.b16 %v1086
        %v1127 = vunpack.c.l.b16 %v1087
        %v1128 = vunpack.c.l.b16 %v1088
        %v1129 = vunpack.c.l.b16 %v1089
        %v1130 = vunpack.c.l.b16 %v1090
        %v1131 = vunpack.c.l.b16 %v1091
        %v1132 = vunpack.c.l.b16 %v1092
        %v1133 = vunpack.c.l.b16 %v1093
        %v1134 = vpack.c.b16 %v1119, %v1118
        %v1135 = vpack.c.b16 %v1121, %v1120
        %v1136 = vpack.c.b16 %v1123, %v1122
        %v1137 = vpack.c.b16 %v1125, %v1124
        %v1138 = vpack.c.b16 %v1127, %v1126
        %v1139 = vpack.c.b16 %v1129, %v1128
        %v1140 = vpack.c.b16 %v1131, %v1130
        %v1141 = vpack.c.b16 %v1133, %v1132
        %1150 = vmatprep.subr.bf16.mxu0 0
        %1151 = vmatpush1.bf16.msra.mxu0 %v1094
        %1152 = vmatprep.subr.bf16.mxu0 0
        %1153 = vmatpush1.bf16.msra.mxu0 %v1095
        %1154 = vmatprep.subr.bf16.mxu0 0
        %1155 = vmatpush1.bf16.msra.mxu0 %v1096
        %1156 = vmatprep.subr.bf16.mxu0 0
        %1157 = vmatpush1.bf16.msra.mxu0 %v1097
        %1158 = vmatprep.subr.bf16.mxu0 0
        %1159 = vmatpush1.bf16.msra.mxu0 %v1098
        %1160 = vmatprep.subr.bf16.mxu0 0
        %1161 = vmatpush1.bf16.msra.mxu0 %v1099
        %1162 = vmatprep.subr.bf16.mxu0 0
        %1163 = vmatpush1.bf16.msra.mxu0 %v1100
        %1164 = vmatprep.subr.bf16.mxu0 0
        %1165 = vmatpush1.bf16.msra.mxu0 %v1101
        %1166 = vmatprep.subr.bf16.mxu0 0
        %1167 = vmatpush1.bf16.msra.mxu0 0
        %1168 = vmatprep.subr.bf16.mxu0 0
        %1169 = vmatpush1.bf16.msra.mxu0 0
        %1170 = vmatprep.subr.bf16.mxu0 0
        %1171 = vmatpush1.bf16.msra.mxu0 0
        %1172 = vmatprep.subr.bf16.mxu0 0
        %1173 = vmatpush1.bf16.msra.mxu0 0
        %1174 = vmatprep.subr.bf16.mxu0 0
        %1175 = vmatpush1.bf16.msra.mxu0 0
        %1176 = vmatprep.subr.bf16.mxu0 0
        %1177 = vmatpush1.bf16.msra.mxu0 0
        %1178 = vmatprep.subr.bf16.mxu0 0
        %1179 = vmatpush1.bf16.msra.mxu0 0
        %1180 = vmatprep.subr.bf16.mxu0 0
        %1181 = vmatpush1.bf16.msra.mxu0 0
        %1182 = vmatprep.mubr.bf16.mxu0 0
        %1183 = vmatmul.mubr.bf16.gmra.mrb[0].mxu0 %v1134
        %v1184 = vpop.f32.mrb[0].mxu0
        %v1185 = vadd.f32 0.0, %v1184
        %v1186 = vpop.f32.mrb[0].mxu0
        %v1187 = vpop.f32.mrb[0].mxu0
        %v1188 = vadd.f32 0.0, %v1187
        %v1189 = vpop.f32.mrb[0].mxu0
        %1190 = vmatprep.mubr.bf16.mxu0 0
        %1191 = vmatmul.mubr.bf16.gmra.mrb[0].mxu0 %v1135
        %v1192 = vpop.f32.mrb[0].mxu0
        %v1193 = vadd.f32 0.0, %v1192
        %v1194 = vpop.f32.mrb[0].mxu0
        %v1195 = vpop.f32.mrb[0].mxu0
        %v1196 = vadd.f32 0.0, %v1195
        %v1197 = vpop.f32.mrb[0].mxu0
        %1198 = vmatprep.mubr.bf16.mxu0 0
        %1199 = vmatmul.mubr.bf16.gmra.mrb[0].mxu0 %v1136
        %v1200 = vpop.f32.mrb[0].mxu0
        %v1201 = vadd.f32 0.0, %v1200
        %v1202 = vpop.f32.mrb[0].mxu0
        %v1203 = vpop.f32.mrb[0].mxu0
        %v1204 = vadd.f32 0.0, %v1203
        %v1205 = vpop.f32.mrb[0].mxu0
        %1206 = vmatprep.mubr.bf16.mxu0 0
        %1207 = vmatmul.mubr.bf16.gmra.mrb[0].mxu0 %v1137
        %v1208 = vpop.f32.mrb[0].mxu0
        %v1209 = vadd.f32 0.0, %v1208
        %v1210 = vpop.f32.mrb[0].mxu0
        %v1211 = vpop.f32.mrb[0].mxu0
        %v1212 = vadd.f32 0.0, %v1211
        %v1213 = vpop.f32.mrb[0].mxu0
        %1214 = vmatprep.mubr.bf16.mxu0 0
        %1215 = vmatmul.mubr.bf16.gmra.mrb[0].mxu0 %v1138
        %v1216 = vpop.f32.mrb[0].mxu0
        %v1217 = vadd.f32 0.0, %v1216
        %v1218 = vpop.f32.mrb[0].mxu0
        %v1219 = vpop.f32.mrb[0].mxu0
        %v1220 = vadd.f32 0.0, %v1219
        %v1221 = vpop.f32.mrb[0].mxu0
        %1222 = vmatprep.mubr.bf16.mxu0 0
        %1223 = vmatmul.mubr.bf16.gmra.mrb[0].mxu0 %v1139
        %v1224 = vpop.f32.mrb[0].mxu0
        %v1225 = vadd.f32 0.0, %v1224
        %v1226 = vpop.f32.mrb[0].mxu0
        %v1227 = vpop.f32.mrb[0].mxu0
        %v1228 = vadd.f32 0.0, %v1227
        %v1229 = vpop.f32.mrb[0].mxu0
        %1230 = vmatprep.mubr.bf16.mxu0 0
        %1231 = vmatmul.mubr.bf16.gmra.mrb[0].mxu0 %v1140
        %v1232 = vpop.f32.mrb[0].mxu0
        %v1233 = vadd.f32 0.0, %v1232
        %v1234 = vpop.f32.mrb[0].mxu0
        %v1235 = vpop.f32.mrb[0].mxu0
        %v1236 = vadd.f32 0.0, %v1235
        %v1237 = vpop.f32.mrb[0].mxu0
        %1238 = vmatprep.mubr.bf16.mxu0 0
        %1239 = vmatmul.mubr.bf16.gmra.mrb[0].mxu0 %v1141
        %v1240 = vpop.f32.mrb[0].mxu0
        %v1241 = vadd.f32 0.0, %v1240
        %v1242 = vpop.f32.mrb[0].mxu0
        %v1243 = vpop.f32.mrb[0].mxu0
        %v1244 = vadd.f32 0.0, %v1243
        %v1245 = vpop.f32.mrb[0].mxu0
        %1246 = vdwg.mxu0
        %v1247 = vadd.f32 %v1062, %v1185
        %v1248 = vadd.f32 %v1063, %v1188
        %v1249 = vadd.f32 %v1064, %v1193
        %v1250 = vadd.f32 %v1065, %v1196
        %v1251 = vadd.f32 %v1066, %v1201
        %v1252 = vadd.f32 %v1067, %v1204
        %v1253 = vadd.f32 %v1068, %v1209
        %v1254 = vadd.f32 %v1069, %v1212
        %v1255 = vadd.f32 %v1070, %v1217
        %v1256 = vadd.f32 %v1071, %v1220
        %v1257 = vadd.f32 %v1072, %v1225
        %v1258 = vadd.f32 %v1073, %v1228
        %v1259 = vadd.f32 %v1074, %v1233
        %v1260 = vadd.f32 %v1075, %v1236
        %v1261 = vadd.f32 %v1076, %v1241
        %v1262 = vadd.f32 %v1077, %v1244
        %1263 = vset.pattern.permute.xlu0 7
        %1264 = vperm.xlu0 %1263, %v180
        %v1265 = vpop.permute.xlu0 %1264
        %1267 = vset.pattern.permute.xlu0 7
        %1268 = vperm.xlu0 %1267, %v181
        %v1269 = vpop.permute.xlu0 %1268
        %1271 = vset.pattern.permute.xlu0 7
        %1272 = vperm.xlu0 %1271, %v182
        %v1273 = vpop.permute.xlu0 %1272
        %1275 = vset.pattern.permute.xlu0 7
        %1276 = vperm.xlu0 %1275, %v183
        %v1277 = vpop.permute.xlu0 %1276
        %1279 = vset.pattern.permute.xlu0 7
        %1280 = vperm.xlu0 %1279, %v184
        %v1281 = vpop.permute.xlu0 %1280
        %1283 = vset.pattern.permute.xlu0 7
        %1284 = vperm.xlu0 %1283, %v185
        %v1285 = vpop.permute.xlu0 %1284
        %1287 = vset.pattern.permute.xlu0 7
        %1288 = vperm.xlu0 %1287, %v186
        %v1289 = vpop.permute.xlu0 %1288
        %1291 = vset.pattern.permute.xlu0 7
        %1292 = vperm.xlu0 %1291, %v187
        %v1293 = vpop.permute.xlu0 %1292
        %1295 = vset.pattern.permute.xlu0 7
        %1296 = vperm.xlu0 %1295, %v188
        %v1297 = vpop.permute.xlu0 %1296
        %1299 = vset.pattern.permute.xlu0 7
        %1300 = vperm.xlu0 %1299, %v189
        %v1301 = vpop.permute.xlu0 %1300
        %1303 = vset.pattern.permute.xlu0 7
        %1304 = vperm.xlu0 %1303, %v190
        %v1305 = vpop.permute.xlu0 %1304
        %1307 = vset.pattern.permute.xlu0 7
        %1308 = vperm.xlu0 %1307, %v191
        %v1309 = vpop.permute.xlu0 %1308
        %1311 = vset.pattern.permute.xlu0 7
        %1312 = vperm.xlu0 %1311, %v192
        %v1313 = vpop.permute.xlu0 %1312
        %1315 = vset.pattern.permute.xlu0 7
        %1316 = vperm.xlu0 %1315, %v193
        %v1317 = vpop.permute.xlu0 %1316
        %1319 = vset.pattern.permute.xlu0 7
        %1320 = vperm.xlu0 %1319, %v194
        %v1321 = vpop.permute.xlu0 %1320
        %1323 = vset.pattern.permute.xlu0 7
        %1324 = vperm.xlu0 %1323, %v195
        %v1325 = vpop.permute.xlu0 %1324
        %v1327 = vadd.f32 %v1247, %v1265
        %v1328 = vadd.f32 %v1248, %v1269
        %v1329 = vadd.f32 %v1249, %v1273
        %v1330 = vadd.f32 %v1250, %v1277
        %v1331 = vadd.f32 %v1251, %v1281
        %v1332 = vadd.f32 %v1252, %v1285
        %v1333 = vadd.f32 %v1253, %v1289
        %v1334 = vadd.f32 %v1254, %v1293
        %v1335 = vadd.f32 %v1255, %v1297
        %v1336 = vadd.f32 %v1256, %v1301
        %v1337 = vadd.f32 %v1257, %v1305
        %v1338 = vadd.f32 %v1258, %v1309
        %v1339 = vadd.f32 %v1259, %v1313
        %v1340 = vadd.f32 %v1260, %v1317
        %v1341 = vadd.f32 %v1261, %v1321
        %v1342 = vadd.f32 %v1262, %v1325
        %v1343 = vmul.f32 %v1327, 0.01
        %v1344 = vmul.f32 %v1328, 0.01
        %v1345 = vmul.f32 %v1329, 0.01
        %v1346 = vmul.f32 %v1330, 0.01
        %v1347 = vmul.f32 %v1331, 0.01
        %v1348 = vmul.f32 %v1332, 0.01
        %v1349 = vmul.f32 %v1333, 0.01
        %v1350 = vmul.f32 %v1334, 0.01
        %v1351 = vmul.f32 %v1335, 0.01
        %v1352 = vmul.f32 %v1336, 0.01
        %v1353 = vmul.f32 %v1337, 0.01
        %v1354 = vmul.f32 %v1338, 0.01
        %v1355 = vmul.f32 %v1339, 0.01
        %v1356 = vmul.f32 %v1340, 0.01
        %v1357 = vmul.f32 %v1341, 0.01
        %v1358 = vmul.f32 %v1342, 0.01
        %v1359 = vmax.f32 %v1327, %v1343
        %v1360 = vmax.f32 %v1328, %v1344
        %v1361 = vmax.f32 %v1329, %v1345
        %v1362 = vmax.f32 %v1330, %v1346
        %v1363 = vmax.f32 %v1331, %v1347
        %v1364 = vmax.f32 %v1332, %v1348
        %v1365 = vmax.f32 %v1333, %v1349
        %v1366 = vmax.f32 %v1334, %v1350
        %v1367 = vmax.f32 %v1335, %v1351
        %v1368 = vmax.f32 %v1336, %v1352
        %v1369 = vmax.f32 %v1337, %v1353
        %v1370 = vmax.f32 %v1338, %v1354
        %v1371 = vmax.f32 %v1339, %v1355
        %v1372 = vmax.f32 %v1340, %v1356
        %v1373 = vmax.f32 %v1341, %v1357
        %v1374 = vmax.f32 %v1342, %v1358
        %v1375 = vld [vmem:[#allocation2 + $0x80] sm:$0xf]
        %v1376 = vld [vmem:[#allocation2 + $0x84] sm:$0xf]
        %v1377 = vld [vmem:[#allocation2 + $0x88] sm:$0xf]
        %v1378 = vld [vmem:[#allocation2 + $0x8c] sm:$0xf]
        %v1379 = vld [vmem:[#allocation2 + $0x90] sm:$0xf]
        %v1380 = vld [vmem:[#allocation2 + $0x94] sm:$0xf]
        %v1381 = vld [vmem:[#allocation2 + $0x98] sm:$0xf]
        %v1382 = vld [vmem:[#allocation2 + $0x9c] sm:$0xf]
        %v1383 = vld [vmem:[#allocation2 + $0xa0] sm:$0xf]
        %v1384 = vld [vmem:[#allocation2 + $0xa4] sm:$0xf]
        %v1385 = vld [vmem:[#allocation2 + $0xa8] sm:$0xf]
        %v1386 = vld [vmem:[#allocation2 + $0xac] sm:$0xf]
        %v1387 = vld [vmem:[#allocation2 + $0xb0] sm:$0xf]
        %v1388 = vld [vmem:[#allocation2 + $0xb4] sm:$0xf]
        %v1389 = vld [vmem:[#allocation2 + $0xb8] sm:$0xf]
        %v1390 = vld [vmem:[#allocation2 + $0xbc] sm:$0xf]
        %v1391 = vpack.c.bf16 %v1360, %v1359
        %v1392 = vpack.c.bf16 %v1362, %v1361
        %v1393 = vpack.c.bf16 %v1364, %v1363
        %v1394 = vpack.c.bf16 %v1366, %v1365
        %v1395 = vpack.c.bf16 %v1368, %v1367
        %v1396 = vpack.c.bf16 %v1370, %v1369
        %v1397 = vpack.c.bf16 %v1372, %v1371
        %v1398 = vpack.c.bf16 %v1374, %v1373
        %v1415 = vunpack.c.l.b16 %v1375
        %v1416 = vunpack.c.l.b16 %v1376
        %v1417 = vunpack.c.l.b16 %v1377
        %v1418 = vunpack.c.l.b16 %v1378
        %v1419 = vunpack.c.l.b16 %v1379
        %v1420 = vunpack.c.l.b16 %v1380
        %v1421 = vunpack.c.l.b16 %v1381
        %v1422 = vunpack.c.l.b16 %v1382
        %v1423 = vunpack.c.l.b16 %v1383
        %v1424 = vunpack.c.l.b16 %v1384
        %v1425 = vunpack.c.l.b16 %v1385
        %v1426 = vunpack.c.l.b16 %v1386
        %v1427 = vunpack.c.l.b16 %v1387
        %v1428 = vunpack.c.l.b16 %v1388
        %v1429 = vunpack.c.l.b16 %v1389
        %v1430 = vunpack.c.l.b16 %v1390
        %v1431 = vpack.c.b16 %v1416, %v1415
        %v1432 = vpack.c.b16 %v1418, %v1417
        %v1433 = vpack.c.b16 %v1420, %v1419
        %v1434 = vpack.c.b16 %v1422, %v1421
        %v1435 = vpack.c.b16 %v1424, %v1423
        %v1436 = vpack.c.b16 %v1426, %v1425
        %v1437 = vpack.c.b16 %v1428, %v1427
        %v1438 = vpack.c.b16 %v1430, %v1429
        %1447 = vmatprep.subr.bf16.mxu0 0
        %1448 = vmatpush1.bf16.msra.mxu0 %v1391
        %1449 = vmatprep.subr.bf16.mxu0 0
        %1450 = vmatpush1.bf16.msra.mxu0 %v1392
        %1451 = vmatprep.subr.bf16.mxu0 0
        %1452 = vmatpush1.bf16.msra.mxu0 %v1393
        %1453 = vmatprep.subr.bf16.mxu0 0
        %1454 = vmatpush1.bf16.msra.mxu0 %v1394
        %1455 = vmatprep.subr.bf16.mxu0 0
        %1456 = vmatpush1.bf16.msra.mxu0 %v1395
        %1457 = vmatprep.subr.bf16.mxu0 0
        %1458 = vmatpush1.bf16.msra.mxu0 %v1396
        %1459 = vmatprep.subr.bf16.mxu0 0
        %1460 = vmatpush1.bf16.msra.mxu0 %v1397
        %1461 = vmatprep.subr.bf16.mxu0 0
        %1462 = vmatpush1.bf16.msra.mxu0 %v1398
        %1463 = vmatprep.subr.bf16.mxu0 0
        %1464 = vmatpush1.bf16.msra.mxu0 0
        %1465 = vmatprep.subr.bf16.mxu0 0
        %1466 = vmatpush1.bf16.msra.mxu0 0
        %1467 = vmatprep.subr.bf16.mxu0 0
        %1468 = vmatpush1.bf16.msra.mxu0 0
        %1469 = vmatprep.subr.bf16.mxu0 0
        %1470 = vmatpush1.bf16.msra.mxu0 0
        %1471 = vmatprep.subr.bf16.mxu0 0
        %1472 = vmatpush1.bf16.msra.mxu0 0
        %1473 = vmatprep.subr.bf16.mxu0 0
        %1474 = vmatpush1.bf16.msra.mxu0 0
        %1475 = vmatprep.subr.bf16.mxu0 0
        %1476 = vmatpush1.bf16.msra.mxu0 0
        %1477 = vmatprep.subr.bf16.mxu0 0
        %1478 = vmatpush1.bf16.msra.mxu0 0
        %1479 = vmatprep.mubr.bf16.mxu0 0
        %1480 = vmatmul.mubr.bf16.gmra.mrb[0].mxu0 %v1431
        %v1481 = vpop.f32.mrb[0].mxu0
        %v1482 = vadd.f32 0.0, %v1481
        %v1483 = vpop.f32.mrb[0].mxu0
        %v1484 = vpop.f32.mrb[0].mxu0
        %v1485 = vadd.f32 0.0, %v1484
        %v1486 = vpop.f32.mrb[0].mxu0
        %1487 = vmatprep.mubr.bf16.mxu0 0
        %1488 = vmatmul.mubr.bf16.gmra.mrb[0].mxu0 %v1432
        %v1489 = vpop.f32.mrb[0].mxu0
        %v1490 = vadd.f32 0.0, %v1489
        %v1491 = vpop.f32.mrb[0].mxu0
        %v1492 = vpop.f32.mrb[0].mxu0
        %v1493 = vadd.f32 0.0, %v1492
        %v1494 = vpop.f32.mrb[0].mxu0
        %1495 = vmatprep.mubr.bf16.mxu0 0
        %1496 = vmatmul.mubr.bf16.gmra.mrb[0].mxu0 %v1433
        %v1497 = vpop.f32.mrb[0].mxu0
        %v1498 = vadd.f32 0.0, %v1497
        %v1499 = vpop.f32.mrb[0].mxu0
        %v1500 = vpop.f32.mrb[0].mxu0
        %v1501 = vadd.f32 0.0, %v1500
        %v1502 = vpop.f32.mrb[0].mxu0
        %1503 = vmatprep.mubr.bf16.mxu0 0
        %1504 = vmatmul.mubr.bf16.gmra.mrb[0].mxu0 %v1434
        %v1505 = vpop.f32.mrb[0].mxu0
        %v1506 = vadd.f32 0.0, %v1505
        %v1507 = vpop.f32.mrb[0].mxu0
        %v1508 = vpop.f32.mrb[0].mxu0
        %v1509 = vadd.f32 0.0, %v1508
        %v1510 = vpop.f32.mrb[0].mxu0
        %1511 = vmatprep.mubr.bf16.mxu0 0
        %1512 = vmatmul.mubr.bf16.gmra.mrb[0].mxu0 %v1435
        %v1513 = vpop.f32.mrb[0].mxu0
        %v1514 = vadd.f32 0.0, %v1513
        %v1515 = vpop.f32.mrb[0].mxu0
        %v1516 = vpop.f32.mrb[0].mxu0
        %v1517 = vadd.f32 0.0, %v1516
        %v1518 = vpop.f32.mrb[0].mxu0
        %1519 = vmatprep.mubr.bf16.mxu0 0
        %1520 = vmatmul.mubr.bf16.gmra.mrb[0].mxu0 %v1436
        %v1521 = vpop.f32.mrb[0].mxu0
        %v1522 = vadd.f32 0.0, %v1521
        %v1523 = vpop.f32.mrb[0].mxu0
        %v1524 = vpop.f32.mrb[0].mxu0
        %v1525 = vadd.f32 0.0, %v1524
        %v1526 = vpop.f32.mrb[0].mxu0
        %1527 = vmatprep.mubr.bf16.mxu0 0
        %1528 = vmatmul.mubr.bf16.gmra.mrb[0].mxu0 %v1437
        %v1529 = vpop.f32.mrb[0].mxu0
        %v1530 = vadd.f32 0.0, %v1529
        %v1531 = vpop.f32.mrb[0].mxu0
        %v1532 = vpop.f32.mrb[0].mxu0
        %v1533 = vadd.f32 0.0, %v1532
        %v1534 = vpop.f32.mrb[0].mxu0
        %1535 = vmatprep.mubr.bf16.mxu0 0
        %1536 = vmatmul.mubr.bf16.gmra.mrb[0].mxu0 %v1438
        %v1537 = vpop.f32.mrb[0].mxu0
        %v1538 = vadd.f32 0.0, %v1537
        %v1539 = vpop.f32.mrb[0].mxu0
        %v1540 = vpop.f32.mrb[0].mxu0
        %v1541 = vadd.f32 0.0, %v1540
        %v1542 = vpop.f32.mrb[0].mxu0
        %1543 = vdwg.mxu0
        %v1544 = vadd.f32 %v1359, %v1482
        %v1545 = vadd.f32 %v1360, %v1485
        %v1546 = vadd.f32 %v1361, %v1490
        %v1547 = vadd.f32 %v1362, %v1493
        %v1548 = vadd.f32 %v1363, %v1498
        %v1549 = vadd.f32 %v1364, %v1501
        %v1550 = vadd.f32 %v1365, %v1506
        %v1551 = vadd.f32 %v1366, %v1509
        %v1552 = vadd.f32 %v1367, %v1514
        %v1553 = vadd.f32 %v1368, %v1517
        %v1554 = vadd.f32 %v1369, %v1522
        %v1555 = vadd.f32 %v1370, %v1525
        %v1556 = vadd.f32 %v1371, %v1530
        %v1557 = vadd.f32 %v1372, %v1533
        %v1558 = vadd.f32 %v1373, %v1538
        %v1559 = vadd.f32 %v1374, %v1541
        %1560 = vset.pattern.permute.xlu0 8
        %1561 = vperm.xlu0 %1560, %v180
        %v1562 = vpop.permute.xlu0 %1561
        %1564 = vset.pattern.permute.xlu0 8
        %1565 = vperm.xlu0 %1564, %v181
        %v1566 = vpop.permute.xlu0 %1565
        %1568 = vset.pattern.permute.xlu0 8
        %1569 = vperm.xlu0 %1568, %v182
        %v1570 = vpop.permute.xlu0 %1569
        %1572 = vset.pattern.permute.xlu0 8
        %1573 = vperm.xlu0 %1572, %v183
        %v1574 = vpop.permute.xlu0 %1573
        %1576 = vset.pattern.permute.xlu0 8
        %1577 = vperm.xlu0 %1576, %v184
        %v1578 = vpop.permute.xlu0 %1577
        %1580 = vset.pattern.permute.xlu0 8
        %1581 = vperm.xlu0 %1580, %v185
        %v1582 = vpop.permute.xlu0 %1581
        %1584 = vset.pattern.permute.xlu0 8
        %1585 = vperm.xlu0 %1584, %v186
        %v1586 = vpop.permute.xlu0 %1585
        %1588 = vset.pattern.permute.xlu0 8
        %1589 = vperm.xlu0 %1588, %v187
        %v1590 = vpop.permute.xlu0 %1589
        %1592 = vset.pattern.permute.xlu0 8
        %1593 = vperm.xlu0 %1592, %v188
        %v1594 = vpop.permute.xlu0 %1593
        %1596 = vset.pattern.permute.xlu0 8
        %1597 = vperm.xlu0 %1596, %v189
        %v1598 = vpop.permute.xlu0 %1597
        %1600 = vset.pattern.permute.xlu0 8
        %1601 = vperm.xlu0 %1600, %v190
        %v1602 = vpop.permute.xlu0 %1601
        %1604 = vset.pattern.permute.xlu0 8
        %1605 = vperm.xlu0 %1604, %v191
        %v1606 = vpop.permute.xlu0 %1605
        %1608 = vset.pattern.permute.xlu0 8
        %1609 = vperm.xlu0 %1608, %v192
        %v1610 = vpop.permute.xlu0 %1609
        %1612 = vset.pattern.permute.xlu0 8
        %1613 = vperm.xlu0 %1612, %v193
        %v1614 = vpop.permute.xlu0 %1613
        %1616 = vset.pattern.permute.xlu0 8
        %1617 = vperm.xlu0 %1616, %v194
        %v1618 = vpop.permute.xlu0 %1617
        %1620 = vset.pattern.permute.xlu0 8
        %1621 = vperm.xlu0 %1620, %v195
        %v1622 = vpop.permute.xlu0 %1621
        %v1624 = vadd.f32 %v1544, %v1562
        %v1625 = vadd.f32 %v1545, %v1566
        %v1626 = vadd.f32 %v1546, %v1570
        %v1627 = vadd.f32 %v1547, %v1574
        %v1628 = vadd.f32 %v1548, %v1578
        %v1629 = vadd.f32 %v1549, %v1582
        %v1630 = vadd.f32 %v1550, %v1586
        %v1631 = vadd.f32 %v1551, %v1590
        %v1632 = vadd.f32 %v1552, %v1594
        %v1633 = vadd.f32 %v1553, %v1598
        %v1634 = vadd.f32 %v1554, %v1602
        %v1635 = vadd.f32 %v1555, %v1606
        %v1636 = vadd.f32 %v1556, %v1610
        %v1637 = vadd.f32 %v1557, %v1614
        %v1638 = vadd.f32 %v1558, %v1618
        %v1639 = vadd.f32 %v1559, %v1622
        %v1640 = vmul.f32 %v1624, 0.01
        %v1641 = vmul.f32 %v1625, 0.01
        %v1642 = vmul.f32 %v1626, 0.01
        %v1643 = vmul.f32 %v1627, 0.01
        %v1644 = vmul.f32 %v1628, 0.01
        %v1645 = vmul.f32 %v1629, 0.01
        %v1646 = vmul.f32 %v1630, 0.01
        %v1647 = vmul.f32 %v1631, 0.01
        %v1648 = vmul.f32 %v1632, 0.01
        %v1649 = vmul.f32 %v1633, 0.01
        %v1650 = vmul.f32 %v1634, 0.01
        %v1651 = vmul.f32 %v1635, 0.01
        %v1652 = vmul.f32 %v1636, 0.01
        %v1653 = vmul.f32 %v1637, 0.01
        %v1654 = vmul.f32 %v1638, 0.01
        %v1655 = vmul.f32 %v1639, 0.01
        %v1656 = vmax.f32 %v1624, %v1640
        %v1657 = vmax.f32 %v1625, %v1641
        %v1658 = vmax.f32 %v1626, %v1642
        %v1659 = vmax.f32 %v1627, %v1643
        %v1660 = vmax.f32 %v1628, %v1644
        %v1661 = vmax.f32 %v1629, %v1645
        %v1662 = vmax.f32 %v1630, %v1646
        %v1663 = vmax.f32 %v1631, %v1647
        %v1664 = vmax.f32 %v1632, %v1648
        %v1665 = vmax.f32 %v1633, %v1649
        %v1666 = vmax.f32 %v1634, %v1650
        %v1667 = vmax.f32 %v1635, %v1651
        %v1668 = vmax.f32 %v1636, %v1652
        %v1669 = vmax.f32 %v1637, %v1653
        %v1670 = vmax.f32 %v1638, %v1654
        %v1671 = vmax.f32 %v1639, %v1655
        %v1672 = vld [vmem:[#allocation2 + $0xc0] sm:$0xf]
        %v1673 = vld [vmem:[#allocation2 + $0xc4] sm:$0xf]
        %v1674 = vld [vmem:[#allocation2 + $0xc8] sm:$0xf]
        %v1675 = vld [vmem:[#allocation2 + $0xcc] sm:$0xf]
        %v1676 = vld [vmem:[#allocation2 + $0xd0] sm:$0xf]
        %v1677 = vld [vmem:[#allocation2 + $0xd4] sm:$0xf]
        %v1678 = vld [vmem:[#allocation2 + $0xd8] sm:$0xf]
        %v1679 = vld [vmem:[#allocation2 + $0xdc] sm:$0xf]
        %v1680 = vld [vmem:[#allocation2 + $0xe0] sm:$0xf]
        %v1681 = vld [vmem:[#allocation2 + $0xe4] sm:$0xf]
        %v1682 = vld [vmem:[#allocation2 + $0xe8] sm:$0xf]
        %v1683 = vld [vmem:[#allocation2 + $0xec] sm:$0xf]
        %v1684 = vld [vmem:[#allocation2 + $0xf0] sm:$0xf]
        %v1685 = vld [vmem:[#allocation2 + $0xf4] sm:$0xf]
        %v1686 = vld [vmem:[#allocation2 + $0xf8] sm:$0xf]
        %v1687 = vld [vmem:[#allocation2 + $0xfc] sm:$0xf]
        %v1688 = vpack.c.bf16 %v1657, %v1656
        %v1689 = vpack.c.bf16 %v1659, %v1658
        %v1690 = vpack.c.bf16 %v1661, %v1660
        %v1691 = vpack.c.bf16 %v1663, %v1662
        %v1692 = vpack.c.bf16 %v1665, %v1664
        %v1693 = vpack.c.bf16 %v1667, %v1666
        %v1694 = vpack.c.bf16 %v1669, %v1668
        %v1695 = vpack.c.bf16 %v1671, %v1670
        %v1712 = vunpack.c.l.b16 %v1672
        %v1713 = vunpack.c.l.b16 %v1673
        %v1714 = vunpack.c.l.b16 %v1674
        %v1715 = vunpack.c.l.b16 %v1675
        %v1716 = vunpack.c.l.b16 %v1676
        %v1717 = vunpack.c.l.b16 %v1677
        %v1718 = vunpack.c.l.b16 %v1678
        %v1719 = vunpack.c.l.b16 %v1679
        %v1720 = vunpack.c.l.b16 %v1680
        %v1721 = vunpack.c.l.b16 %v1681
        %v1722 = vunpack.c.l.b16 %v1682
        %v1723 = vunpack.c.l.b16 %v1683
        %v1724 = vunpack.c.l.b16 %v1684
        %v1725 = vunpack.c.l.b16 %v1685
        %v1726 = vunpack.c.l.b16 %v1686
        %v1727 = vunpack.c.l.b16 %v1687
        %v1728 = vpack.c.b16 %v1713, %v1712
        %v1729 = vpack.c.b16 %v1715, %v1714
        %v1730 = vpack.c.b16 %v1717, %v1716
        %v1731 = vpack.c.b16 %v1719, %v1718
        %v1732 = vpack.c.b16 %v1721, %v1720
        %v1733 = vpack.c.b16 %v1723, %v1722
        %v1734 = vpack.c.b16 %v1725, %v1724
        %v1735 = vpack.c.b16 %v1727, %v1726
        %1744 = vmatprep.subr.bf16.mxu0 0
        %1745 = vmatpush1.bf16.msra.mxu0 %v1688
        %1746 = vmatprep.subr.bf16.mxu0 0
        %1747 = vmatpush1.bf16.msra.mxu0 %v1689
        %1748 = vmatprep.subr.bf16.mxu0 0
        %1749 = vmatpush1.bf16.msra.mxu0 %v1690
        %1750 = vmatprep.subr.bf16.mxu0 0
        %1751 = vmatpush1.bf16.msra.mxu0 %v1691
        %1752 = vmatprep.subr.bf16.mxu0 0
        %1753 = vmatpush1.bf16.msra.mxu0 %v1692
        %1754 = vmatprep.subr.bf16.mxu0 0
        %1755 = vmatpush1.bf16.msra.mxu0 %v1693
        %1756 = vmatprep.subr.bf16.mxu0 0
        %1757 = vmatpush1.bf16.msra.mxu0 %v1694
        %1758 = vmatprep.subr.bf16.mxu0 0
        %1759 = vmatpush1.bf16.msra.mxu0 %v1695
        %1760 = vmatprep.subr.bf16.mxu0 0
        %1761 = vmatpush1.bf16.msra.mxu0 0
        %1762 = vmatprep.subr.bf16.mxu0 0
        %1763 = vmatpush1.bf16.msra.mxu0 0
        %1764 = vmatprep.subr.bf16.mxu0 0
        %1765 = vmatpush1.bf16.msra.mxu0 0
        %1766 = vmatprep.subr.bf16.mxu0 0
        %1767 = vmatpush1.bf16.msra.mxu0 0
        %1768 = vmatprep.subr.bf16.mxu0 0
        %1769 = vmatpush1.bf16.msra.mxu0 0
        %1770 = vmatprep.subr.bf16.mxu0 0
        %1771 = vmatpush1.bf16.msra.mxu0 0
        %1772 = vmatprep.subr.bf16.mxu0 0
        %1773 = vmatpush1.bf16.msra.mxu0 0
        %1774 = vmatprep.subr.bf16.mxu0 0
        %1775 = vmatpush1.bf16.msra.mxu0 0
        %1776 = vmatprep.mubr.bf16.mxu0 0
        %1777 = vmatmul.mubr.bf16.gmra.mrb[0].mxu0 %v1728
        %v1778 = vpop.f32.mrb[0].mxu0
        %v1779 = vadd.f32 0.0, %v1778
        %v1780 = vpop.f32.mrb[0].mxu0
        %v1781 = vpop.f32.mrb[0].mxu0
        %v1782 = vadd.f32 0.0, %v1781
        %v1783 = vpop.f32.mrb[0].mxu0
        %1784 = vmatprep.mubr.bf16.mxu0 0
        %1785 = vmatmul.mubr.bf16.gmra.mrb[0].mxu0 %v1729
        %v1786 = vpop.f32.mrb[0].mxu0
        %v1787 = vadd.f32 0.0, %v1786
        %v1788 = vpop.f32.mrb[0].mxu0
        %v1789 = vpop.f32.mrb[0].mxu0
        %v1790 = vadd.f32 0.0, %v1789
        %v1791 = vpop.f32.mrb[0].mxu0
        %1792 = vmatprep.mubr.bf16.mxu0 0
        %1793 = vmatmul.mubr.bf16.gmra.mrb[0].mxu0 %v1730
        %v1794 = vpop.f32.mrb[0].mxu0
        %v1795 = vadd.f32 0.0, %v1794
        %v1796 = vpop.f32.mrb[0].mxu0
        %v1797 = vpop.f32.mrb[0].mxu0
        %v1798 = vadd.f32 0.0, %v1797
        %v1799 = vpop.f32.mrb[0].mxu0
        %1800 = vmatprep.mubr.bf16.mxu0 0
        %1801 = vmatmul.mubr.bf16.gmra.mrb[0].mxu0 %v1731
        %v1802 = vpop.f32.mrb[0].mxu0
        %v1803 = vadd.f32 0.0, %v1802
        %v1804 = vpop.f32.mrb[0].mxu0
        %v1805 = vpop.f32.mrb[0].mxu0
        %v1806 = vadd.f32 0.0, %v1805
        %v1807 = vpop.f32.mrb[0].mxu0
        %1808 = vmatprep.mubr.bf16.mxu0 0
        %1809 = vmatmul.mubr.bf16.gmra.mrb[0].mxu0 %v1732
        %v1810 = vpop.f32.mrb[0].mxu0
        %v1811 = vadd.f32 0.0, %v1810
        %v1812 = vpop.f32.mrb[0].mxu0
        %v1813 = vpop.f32.mrb[0].mxu0
        %v1814 = vadd.f32 0.0, %v1813
        %v1815 = vpop.f32.mrb[0].mxu0
        %1816 = vmatprep.mubr.bf16.mxu0 0
        %1817 = vmatmul.mubr.bf16.gmra.mrb[0].mxu0 %v1733
        %v1818 = vpop.f32.mrb[0].mxu0
        %v1819 = vadd.f32 0.0, %v1818
        %v1820 = vpop.f32.mrb[0].mxu0
        %v1821 = vpop.f32.mrb[0].mxu0
        %v1822 = vadd.f32 0.0, %v1821
        %v1823 = vpop.f32.mrb[0].mxu0
        %1824 = vmatprep.mubr.bf16.mxu0 0
        %1825 = vmatmul.mubr.bf16.gmra.mrb[0].mxu0 %v1734
        %v1826 = vpop.f32.mrb[0].mxu0
        %v1827 = vadd.f32 0.0, %v1826
        %v1828 = vpop.f32.mrb[0].mxu0
        %v1829 = vpop.f32.mrb[0].mxu0
        %v1830 = vadd.f32 0.0, %v1829
        %v1831 = vpop.f32.mrb[0].mxu0
        %1832 = vmatprep.mubr.bf16.mxu0 0
        %1833 = vmatmul.mubr.bf16.gmra.mrb[0].mxu0 %v1735
        %v1834 = vpop.f32.mrb[0].mxu0
        %v1835 = vadd.f32 0.0, %v1834
        %v1836 = vpop.f32.mrb[0].mxu0
        %v1837 = vpop.f32.mrb[0].mxu0
        %v1838 = vadd.f32 0.0, %v1837
        %v1839 = vpop.f32.mrb[0].mxu0
        %1840 = vdwg.mxu0
        %v1841 = vadd.f32 %v1656, %v1779
        %v1842 = vadd.f32 %v1657, %v1782
        %v1843 = vadd.f32 %v1658, %v1787
        %v1844 = vadd.f32 %v1659, %v1790
        %v1845 = vadd.f32 %v1660, %v1795
        %v1846 = vadd.f32 %v1661, %v1798
        %v1847 = vadd.f32 %v1662, %v1803
        %v1848 = vadd.f32 %v1663, %v1806
        %v1849 = vadd.f32 %v1664, %v1811
        %v1850 = vadd.f32 %v1665, %v1814
        %v1851 = vadd.f32 %v1666, %v1819
        %v1852 = vadd.f32 %v1667, %v1822
        %v1853 = vadd.f32 %v1668, %v1827
        %v1854 = vadd.f32 %v1669, %v1830
        %v1855 = vadd.f32 %v1670, %v1835
        %v1856 = vadd.f32 %v1671, %v1838
        %1857 = vset.pattern.permute.xlu0 9
        %1858 = vperm.xlu0 %1857, %v180
        %v1859 = vpop.permute.xlu0 %1858
        %1861 = vset.pattern.permute.xlu0 9
        %1862 = vperm.xlu0 %1861, %v181
        %v1863 = vpop.permute.xlu0 %1862
        %1865 = vset.pattern.permute.xlu0 9
        %1866 = vperm.xlu0 %1865, %v182
        %v1867 = vpop.permute.xlu0 %1866
        %1869 = vset.pattern.permute.xlu0 9
        %1870 = vperm.xlu0 %1869, %v183
        %v1871 = vpop.permute.xlu0 %1870
        %1873 = vset.pattern.permute.xlu0 9
        %1874 = vperm.xlu0 %1873, %v184
        %v1875 = vpop.permute.xlu0 %1874
        %1877 = vset.pattern.permute.xlu0 9
        %1878 = vperm.xlu0 %1877, %v185
        %v1879 = vpop.permute.xlu0 %1878
        %1881 = vset.pattern.permute.xlu0 9
        %1882 = vperm.xlu0 %1881, %v186
        %v1883 = vpop.permute.xlu0 %1882
        %1885 = vset.pattern.permute.xlu0 9
        %1886 = vperm.xlu0 %1885, %v187
        %v1887 = vpop.permute.xlu0 %1886
        %1889 = vset.pattern.permute.xlu0 9
        %1890 = vperm.xlu0 %1889, %v188
        %v1891 = vpop.permute.xlu0 %1890
        %1893 = vset.pattern.permute.xlu0 9
        %1894 = vperm.xlu0 %1893, %v189
        %v1895 = vpop.permute.xlu0 %1894
        %1897 = vset.pattern.permute.xlu0 9
        %1898 = vperm.xlu0 %1897, %v190
        %v1899 = vpop.permute.xlu0 %1898
        %1901 = vset.pattern.permute.xlu0 9
        %1902 = vperm.xlu0 %1901, %v191
        %v1903 = vpop.permute.xlu0 %1902
        %1905 = vset.pattern.permute.xlu0 9
        %1906 = vperm.xlu0 %1905, %v192
        %v1907 = vpop.permute.xlu0 %1906
        %1909 = vset.pattern.permute.xlu0 9
        %1910 = vperm.xlu0 %1909, %v193
        %v1911 = vpop.permute.xlu0 %1910
        %1913 = vset.pattern.permute.xlu0 9
        %1914 = vperm.xlu0 %1913, %v194
        %v1915 = vpop.permute.xlu0 %1914
        %1917 = vset.pattern.permute.xlu0 9
        %1918 = vperm.xlu0 %1917, %v195
        %v1919 = vpop.permute.xlu0 %1918
        %v1921 = vadd.f32 %v1841, %v1859
        %v1922 = vadd.f32 %v1842, %v1863
        %v1923 = vadd.f32 %v1843, %v1867
        %v1924 = vadd.f32 %v1844, %v1871
        %v1925 = vadd.f32 %v1845, %v1875
        %v1926 = vadd.f32 %v1846, %v1879
        %v1927 = vadd.f32 %v1847, %v1883
        %v1928 = vadd.f32 %v1848, %v1887
        %v1929 = vadd.f32 %v1849, %v1891
        %v1930 = vadd.f32 %v1850, %v1895
        %v1931 = vadd.f32 %v1851, %v1899
        %v1932 = vadd.f32 %v1852, %v1903
        %v1933 = vadd.f32 %v1853, %v1907
        %v1934 = vadd.f32 %v1854, %v1911
        %v1935 = vadd.f32 %v1855, %v1915
        %v1936 = vadd.f32 %v1856, %v1919
        %v1937 = vmul.f32 %v1921, 0.01
        %v1938 = vmul.f32 %v1922, 0.01
        %v1939 = vmul.f32 %v1923, 0.01
        %v1940 = vmul.f32 %v1924, 0.01
        %v1941 = vmul.f32 %v1925, 0.01
        %v1942 = vmul.f32 %v1926, 0.01
        %v1943 = vmul.f32 %v1927, 0.01
        %v1944 = vmul.f32 %v1928, 0.01
        %v1945 = vmul.f32 %v1929, 0.01
        %v1946 = vmul.f32 %v1930, 0.01
        %v1947 = vmul.f32 %v1931, 0.01
        %v1948 = vmul.f32 %v1932, 0.01
        %v1949 = vmul.f32 %v1933, 0.01
        %v1950 = vmul.f32 %v1934, 0.01
        %v1951 = vmul.f32 %v1935, 0.01
        %v1952 = vmul.f32 %v1936, 0.01
        %v1953 = vmax.f32 %v1921, %v1937
        %v1954 = vmax.f32 %v1922, %v1938
        %v1955 = vmax.f32 %v1923, %v1939
        %v1956 = vmax.f32 %v1924, %v1940
        %v1957 = vmax.f32 %v1925, %v1941
        %v1958 = vmax.f32 %v1926, %v1942
        %v1959 = vmax.f32 %v1927, %v1943
        %v1960 = vmax.f32 %v1928, %v1944
        %v1961 = vmax.f32 %v1929, %v1945
        %v1962 = vmax.f32 %v1930, %v1946
        %v1963 = vmax.f32 %v1931, %v1947
        %v1964 = vmax.f32 %v1932, %v1948
        %v1965 = vmax.f32 %v1933, %v1949
        %v1966 = vmax.f32 %v1934, %v1950
        %v1967 = vmax.f32 %v1935, %v1951
        %v1968 = vmax.f32 %v1936, %v1952
        %v1969 = vld [vmem:[#allocation2 + $0x100] sm:$0xf]
        %v1970 = vld [vmem:[#allocation2 + $0x104] sm:$0xf]
        %v1971 = vld [vmem:[#allocation2 + $0x108] sm:$0xf]
        %v1972 = vld [vmem:[#allocation2 + $0x10c] sm:$0xf]
        %v1973 = vld [vmem:[#allocation2 + $0x110] sm:$0xf]
        %v1974 = vld [vmem:[#allocation2 + $0x114] sm:$0xf]
        %v1975 = vld [vmem:[#allocation2 + $0x118] sm:$0xf]
        %v1976 = vld [vmem:[#allocation2 + $0x11c] sm:$0xf]
        %v1977 = vld [vmem:[#allocation2 + $0x120] sm:$0xf]
        %v1978 = vld [vmem:[#allocation2 + $0x124] sm:$0xf]
        %v1979 = vld [vmem:[#allocation2 + $0x128] sm:$0xf]
        %v1980 = vld [vmem:[#allocation2 + $0x12c] sm:$0xf]
        %v1981 = vld [vmem:[#allocation2 + $0x130] sm:$0xf]
        %v1982 = vld [vmem:[#allocation2 + $0x134] sm:$0xf]
        %v1983 = vld [vmem:[#allocation2 + $0x138] sm:$0xf]
        %v1984 = vld [vmem:[#allocation2 + $0x13c] sm:$0xf]
        %v1985 = vpack.c.bf16 %v1954, %v1953
        %v1986 = vpack.c.bf16 %v1956, %v1955
        %v1987 = vpack.c.bf16 %v1958, %v1957
        %v1988 = vpack.c.bf16 %v1960, %v1959
        %v1989 = vpack.c.bf16 %v1962, %v1961
        %v1990 = vpack.c.bf16 %v1964, %v1963
        %v1991 = vpack.c.bf16 %v1966, %v1965
        %v1992 = vpack.c.bf16 %v1968, %v1967
        %v2009 = vunpack.c.l.b16 %v1969
        %v2010 = vunpack.c.l.b16 %v1970
        %v2011 = vunpack.c.l.b16 %v1971
        %v2012 = vunpack.c.l.b16 %v1972
        %v2013 = vunpack.c.l.b16 %v1973
        %v2014 = vunpack.c.l.b16 %v1974
        %v2015 = vunpack.c.l.b16 %v1975
        %v2016 = vunpack.c.l.b16 %v1976
        %v2017 = vunpack.c.l.b16 %v1977
        %v2018 = vunpack.c.l.b16 %v1978
        %v2019 = vunpack.c.l.b16 %v1979
        %v2020 = vunpack.c.l.b16 %v1980
        %v2021 = vunpack.c.l.b16 %v1981
        %v2022 = vunpack.c.l.b16 %v1982
        %v2023 = vunpack.c.l.b16 %v1983
        %v2024 = vunpack.c.l.b16 %v1984
        %v2025 = vpack.c.b16 %v2010, %v2009
        %v2026 = vpack.c.b16 %v2012, %v2011
        %v2027 = vpack.c.b16 %v2014, %v2013
        %v2028 = vpack.c.b16 %v2016, %v2015
        %v2029 = vpack.c.b16 %v2018, %v2017
        %v2030 = vpack.c.b16 %v2020, %v2019
        %v2031 = vpack.c.b16 %v2022, %v2021
        %v2032 = vpack.c.b16 %v2024, %v2023
        %2041 = vmatprep.subr.bf16.mxu0 0
        %2042 = vmatpush1.bf16.msra.mxu0 %v1985
        %2043 = vmatprep.subr.bf16.mxu0 0
        %2044 = vmatpush1.bf16.msra.mxu0 %v1986
        %2045 = vmatprep.subr.bf16.mxu0 0
        %2046 = vmatpush1.bf16.msra.mxu0 %v1987
        %2047 = vmatprep.subr.bf16.mxu0 0
        %2048 = vmatpush1.bf16.msra.mxu0 %v1988
        %2049 = vmatprep.subr.bf16.mxu0 0
        %2050 = vmatpush1.bf16.msra.mxu0 %v1989
        %2051 = vmatprep.subr.bf16.mxu0 0
        %2052 = vmatpush1.bf16.msra.mxu0 %v1990
        %2053 = vmatprep.subr.bf16.mxu0 0
        %2054 = vmatpush1.bf16.msra.mxu0 %v1991
        %2055 = vmatprep.subr.bf16.mxu0 0
        %2056 = vmatpush1.bf16.msra.mxu0 %v1992
        %2057 = vmatprep.subr.bf16.mxu0 0
        %2058 = vmatpush1.bf16.msra.mxu0 0
        %2059 = vmatprep.subr.bf16.mxu0 0
        %2060 = vmatpush1.bf16.msra.mxu0 0
        %2061 = vmatprep.subr.bf16.mxu0 0
        %2062 = vmatpush1.bf16.msra.mxu0 0
        %2063 = vmatprep.subr.bf16.mxu0 0
        %2064 = vmatpush1.bf16.msra.mxu0 0
        %2065 = vmatprep.subr.bf16.mxu0 0
        %2066 = vmatpush1.bf16.msra.mxu0 0
        %2067 = vmatprep.subr.bf16.mxu0 0
        %2068 = vmatpush1.bf16.msra.mxu0 0
        %2069 = vmatprep.subr.bf16.mxu0 0
        %2070 = vmatpush1.bf16.msra.mxu0 0
        %2071 = vmatprep.subr.bf16.mxu0 0
        %2072 = vmatpush1.bf16.msra.mxu0 0
        %2073 = vmatprep.mubr.bf16.mxu0 0
        %2074 = vmatmul.mubr.bf16.gmra.mrb[0].mxu0 %v2025
        %v2075 = vpop.f32.mrb[0].mxu0
        %v2076 = vadd.f32 0.0, %v2075
        %v2077 = vpop.f32.mrb[0].mxu0
        %v2078 = vpop.f32.mrb[0].mxu0
        %v2079 = vadd.f32 0.0, %v2078
        %v2080 = vpop.f32.mrb[0].mxu0
        %2081 = vmatprep.mubr.bf16.mxu0 0
        %2082 = vmatmul.mubr.bf16.gmra.mrb[0].mxu0 %v2026
        %v2083 = vpop.f32.mrb[0].mxu0
        %v2084 = vadd.f32 0.0, %v2083
        %v2085 = vpop.f32.mrb[0].mxu0
        %v2086 = vpop.f32.mrb[0].mxu0
        %v2087 = vadd.f32 0.0, %v2086
        %v2088 = vpop.f32.mrb[0].mxu0
        %2089 = vmatprep.mubr.bf16.mxu0 0
        %2090 = vmatmul.mubr.bf16.gmra.mrb[0].mxu0 %v2027
        %v2091 = vpop.f32.mrb[0].mxu0
        %v2092 = vadd.f32 0.0, %v2091
        %v2093 = vpop.f32.mrb[0].mxu0
        %v2094 = vpop.f32.mrb[0].mxu0
        %v2095 = vadd.f32 0.0, %v2094
        %v2096 = vpop.f32.mrb[0].mxu0
        %2097 = vmatprep.mubr.bf16.mxu0 0
        %2098 = vmatmul.mubr.bf16.gmra.mrb[0].mxu0 %v2028
        %v2099 = vpop.f32.mrb[0].mxu0
        %v2100 = vadd.f32 0.0, %v2099
        %v2101 = vpop.f32.mrb[0].mxu0
        %v2102 = vpop.f32.mrb[0].mxu0
        %v2103 = vadd.f32 0.0, %v2102
        %v2104 = vpop.f32.mrb[0].mxu0
        %2105 = vmatprep.mubr.bf16.mxu0 0
        %2106 = vmatmul.mubr.bf16.gmra.mrb[0].mxu0 %v2029
        %v2107 = vpop.f32.mrb[0].mxu0
        %v2108 = vadd.f32 0.0, %v2107
        %v2109 = vpop.f32.mrb[0].mxu0
        %v2110 = vpop.f32.mrb[0].mxu0
        %v2111 = vadd.f32 0.0, %v2110
        %v2112 = vpop.f32.mrb[0].mxu0
        %2113 = vmatprep.mubr.bf16.mxu0 0
        %2114 = vmatmul.mubr.bf16.gmra.mrb[0].mxu0 %v2030
        %v2115 = vpop.f32.mrb[0].mxu0
        %v2116 = vadd.f32 0.0, %v2115
        %v2117 = vpop.f32.mrb[0].mxu0
        %v2118 = vpop.f32.mrb[0].mxu0
        %v2119 = vadd.f32 0.0, %v2118
        %v2120 = vpop.f32.mrb[0].mxu0
        %2121 = vmatprep.mubr.bf16.mxu0 0
        %2122 = vmatmul.mubr.bf16.gmra.mrb[0].mxu0 %v2031
        %v2123 = vpop.f32.mrb[0].mxu0
        %v2124 = vadd.f32 0.0, %v2123
        %v2125 = vpop.f32.mrb[0].mxu0
        %v2126 = vpop.f32.mrb[0].mxu0
        %v2127 = vadd.f32 0.0, %v2126
        %v2128 = vpop.f32.mrb[0].mxu0
        %2129 = vmatprep.mubr.bf16.mxu0 0
        %2130 = vmatmul.mubr.bf16.gmra.mrb[0].mxu0 %v2032
        %v2131 = vpop.f32.mrb[0].mxu0
        %v2132 = vadd.f32 0.0, %v2131
        %v2133 = vpop.f32.mrb[0].mxu0
        %v2134 = vpop.f32.mrb[0].mxu0
        %v2135 = vadd.f32 0.0, %v2134
        %v2136 = vpop.f32.mrb[0].mxu0
        %2137 = vdwg.mxu0
        %v2138 = vadd.f32 %v1953, %v2076
        %v2139 = vadd.f32 %v1954, %v2079
        %v2140 = vadd.f32 %v1955, %v2084
        %v2141 = vadd.f32 %v1956, %v2087
        %v2142 = vadd.f32 %v1957, %v2092
        %v2143 = vadd.f32 %v1958, %v2095
        %v2144 = vadd.f32 %v1959, %v2100
        %v2145 = vadd.f32 %v1960, %v2103
        %v2146 = vadd.f32 %v1961, %v2108
        %v2147 = vadd.f32 %v1962, %v2111
        %v2148 = vadd.f32 %v1963, %v2116
        %v2149 = vadd.f32 %v1964, %v2119
        %v2150 = vadd.f32 %v1965, %v2124
        %v2151 = vadd.f32 %v1966, %v2127
        %v2152 = vadd.f32 %v1967, %v2132
        %v2153 = vadd.f32 %v1968, %v2135
        %2154 = vset.pattern.permute.xlu0 10
        %2155 = vperm.xlu0 %2154, %v180
        %v2156 = vpop.permute.xlu0 %2155
        %2158 = vset.pattern.permute.xlu0 10
        %2159 = vperm.xlu0 %2158, %v181
        %v2160 = vpop.permute.xlu0 %2159
        %2162 = vset.pattern.permute.xlu0 10
        %2163 = vperm.xlu0 %2162, %v182
        %v2164 = vpop.permute.xlu0 %2163
        %2166 = vset.pattern.permute.xlu0 10
        %2167 = vperm.xlu0 %2166, %v183
        %v2168 = vpop.permute.xlu0 %2167
        %2170 = vset.pattern.permute.xlu0 10
        %2171 = vperm.xlu0 %2170, %v184
        %v2172 = vpop.permute.xlu0 %2171
        %2174 = vset.pattern.permute.xlu0 10
        %2175 = vperm.xlu0 %2174, %v185
        %v2176 = vpop.permute.xlu0 %2175
        %2178 = vset.pattern.permute.xlu0 10
        %2179 = vperm.xlu0 %2178, %v186
        %v2180 = vpop.permute.xlu0 %2179
        %2182 = vset.pattern.permute.xlu0 10
        %2183 = vperm.xlu0 %2182, %v187
        %v2184 = vpop.permute.xlu0 %2183
        %2186 = vset.pattern.permute.xlu0 10
        %2187 = vperm.xlu0 %2186, %v188
        %v2188 = vpop.permute.xlu0 %2187
        %2190 = vset.pattern.permute.xlu0 10
        %2191 = vperm.xlu0 %2190, %v189
        %v2192 = vpop.permute.xlu0 %2191
        %2194 = vset.pattern.permute.xlu0 10
        %2195 = vperm.xlu0 %2194, %v190
        %v2196 = vpop.permute.xlu0 %2195
        %2198 = vset.pattern.permute.xlu0 10
        %2199 = vperm.xlu0 %2198, %v191
        %v2200 = vpop.permute.xlu0 %2199
        %2202 = vset.pattern.permute.xlu0 10
        %2203 = vperm.xlu0 %2202, %v192
        %v2204 = vpop.permute.xlu0 %2203
        %2206 = vset.pattern.permute.xlu0 10
        %2207 = vperm.xlu0 %2206, %v193
        %v2208 = vpop.permute.xlu0 %2207
        %2210 = vset.pattern.permute.xlu0 10
        %2211 = vperm.xlu0 %2210, %v194
        %v2212 = vpop.permute.xlu0 %2211
        %2214 = vset.pattern.permute.xlu0 10
        %2215 = vperm.xlu0 %2214, %v195
        %v2216 = vpop.permute.xlu0 %2215
        %v2218 = vadd.f32 %v2138, %v2156
        %v2219 = vadd.f32 %v2139, %v2160
        %v2220 = vadd.f32 %v2140, %v2164
        %v2221 = vadd.f32 %v2141, %v2168
        %v2222 = vadd.f32 %v2142, %v2172
        %v2223 = vadd.f32 %v2143, %v2176
        %v2224 = vadd.f32 %v2144, %v2180
        %v2225 = vadd.f32 %v2145, %v2184
        %v2226 = vadd.f32 %v2146, %v2188
        %v2227 = vadd.f32 %v2147, %v2192
        %v2228 = vadd.f32 %v2148, %v2196
        %v2229 = vadd.f32 %v2149, %v2200
        %v2230 = vadd.f32 %v2150, %v2204
        %v2231 = vadd.f32 %v2151, %v2208
        %v2232 = vadd.f32 %v2152, %v2212
        %v2233 = vadd.f32 %v2153, %v2216
        %v2234 = vmul.f32 %v2218, 0.01
        %v2235 = vmul.f32 %v2219, 0.01
        %v2236 = vmul.f32 %v2220, 0.01
        %v2237 = vmul.f32 %v2221, 0.01
        %v2238 = vmul.f32 %v2222, 0.01
        %v2239 = vmul.f32 %v2223, 0.01
        %v2240 = vmul.f32 %v2224, 0.01
        %v2241 = vmul.f32 %v2225, 0.01
        %v2242 = vmul.f32 %v2226, 0.01
        %v2243 = vmul.f32 %v2227, 0.01
        %v2244 = vmul.f32 %v2228, 0.01
        %v2245 = vmul.f32 %v2229, 0.01
        %v2246 = vmul.f32 %v2230, 0.01
        %v2247 = vmul.f32 %v2231, 0.01
        %v2248 = vmul.f32 %v2232, 0.01
        %v2249 = vmul.f32 %v2233, 0.01
        %v2250 = vmax.f32 %v2218, %v2234
        %v2251 = vmax.f32 %v2219, %v2235
        %v2252 = vmax.f32 %v2220, %v2236
        %v2253 = vmax.f32 %v2221, %v2237
        %v2254 = vmax.f32 %v2222, %v2238
        %v2255 = vmax.f32 %v2223, %v2239
        %v2256 = vmax.f32 %v2224, %v2240
        %v2257 = vmax.f32 %v2225, %v2241
        %v2258 = vmax.f32 %v2226, %v2242
        %v2259 = vmax.f32 %v2227, %v2243
        %v2260 = vmax.f32 %v2228, %v2244
        %v2261 = vmax.f32 %v2229, %v2245
        %v2262 = vmax.f32 %v2230, %v2246
        %v2263 = vmax.f32 %v2231, %v2247
        %v2264 = vmax.f32 %v2232, %v2248
        %v2265 = vmax.f32 %v2233, %v2249
        %v2266 = vadd.f32 %v1062, %v2250
        %v2267 = vadd.f32 %v1063, %v2251
        %v2268 = vadd.f32 %v1064, %v2252
        %v2269 = vadd.f32 %v1065, %v2253
        %v2270 = vadd.f32 %v1066, %v2254
        %v2271 = vadd.f32 %v1067, %v2255
        %v2272 = vadd.f32 %v1068, %v2256
        %v2273 = vadd.f32 %v1069, %v2257
        %v2274 = vadd.f32 %v1070, %v2258
        %v2275 = vadd.f32 %v1071, %v2259
        %v2276 = vadd.f32 %v1072, %v2260
        %v2277 = vadd.f32 %v1073, %v2261
        %v2278 = vadd.f32 %v1074, %v2262
        %v2279 = vadd.f32 %v1075, %v2263
        %v2280 = vadd.f32 %v1076, %v2264
        %v2281 = vadd.f32 %v1077, %v2265
        %v2282 = vld [vmem:[#allocation2 + $0x140] sm:$0xf]
        %v2283 = vld [vmem:[#allocation2 + $0x144] sm:$0xf]
        %v2284 = vld [vmem:[#allocation2 + $0x148] sm:$0xf]
        %v2285 = vld [vmem:[#allocation2 + $0x14c] sm:$0xf]
        %v2286 = vld [vmem:[#allocation2 + $0x150] sm:$0xf]
        %v2287 = vld [vmem:[#allocation2 + $0x154] sm:$0xf]
        %v2288 = vld [vmem:[#allocation2 + $0x158] sm:$0xf]
        %v2289 = vld [vmem:[#allocation2 + $0x15c] sm:$0xf]
        %v2290 = vld [vmem:[#allocation2 + $0x160] sm:$0xf]
        %v2291 = vld [vmem:[#allocation2 + $0x164] sm:$0xf]
        %v2292 = vld [vmem:[#allocation2 + $0x168] sm:$0xf]
        %v2293 = vld [vmem:[#allocation2 + $0x16c] sm:$0xf]
        %v2294 = vld [vmem:[#allocation2 + $0x170] sm:$0xf]
        %v2295 = vld [vmem:[#allocation2 + $0x174] sm:$0xf]
        %v2296 = vld [vmem:[#allocation2 + $0x178] sm:$0xf]
        %v2297 = vld [vmem:[#allocation2 + $0x17c] sm:$0xf]
        %v2298 = vpack.c.bf16 %v2267, %v2266
        %v2299 = vpack.c.bf16 %v2269, %v2268
        %v2300 = vpack.c.bf16 %v2271, %v2270
        %v2301 = vpack.c.bf16 %v2273, %v2272
        %v2302 = vpack.c.bf16 %v2275, %v2274
        %v2303 = vpack.c.bf16 %v2277, %v2276
        %v2304 = vpack.c.bf16 %v2279, %v2278
        %v2305 = vpack.c.bf16 %v2281, %v2280
        %2306 = vset.pattern.permute.xlu0 11
        %2307 = vperm.xlu0 %2306, %v180
        %v2308 = vpop.permute.xlu0 %2307
        %2310 = vset.pattern.permute.xlu0 11
        %2311 = vperm.xlu0 %2310, %v181
        %v2312 = vpop.permute.xlu0 %2311
        %2314 = vset.pattern.permute.xlu0 11
        %2315 = vperm.xlu0 %2314, %v182
        %v2316 = vpop.permute.xlu0 %2315
        %2318 = vset.pattern.permute.xlu0 11
        %2319 = vperm.xlu0 %2318, %v183
        %v2320 = vpop.permute.xlu0 %2319
        %2322 = vset.pattern.permute.xlu0 11
        %2323 = vperm.xlu0 %2322, %v184
        %v2324 = vpop.permute.xlu0 %2323
        %2326 = vset.pattern.permute.xlu0 11
        %2327 = vperm.xlu0 %2326, %v185
        %v2328 = vpop.permute.xlu0 %2327
        %2330 = vset.pattern.permute.xlu0 11
        %2331 = vperm.xlu0 %2330, %v186
        %v2332 = vpop.permute.xlu0 %2331
        %2334 = vset.pattern.permute.xlu0 11
        %2335 = vperm.xlu0 %2334, %v187
        %v2336 = vpop.permute.xlu0 %2335
        %2338 = vset.pattern.permute.xlu0 11
        %2339 = vperm.xlu0 %2338, %v188
        %v2340 = vpop.permute.xlu0 %2339
        %2342 = vset.pattern.permute.xlu0 11
        %2343 = vperm.xlu0 %2342, %v189
        %v2344 = vpop.permute.xlu0 %2343
        %2346 = vset.pattern.permute.xlu0 11
        %2347 = vperm.xlu0 %2346, %v190
        %v2348 = vpop.permute.xlu0 %2347
        %2350 = vset.pattern.permute.xlu0 11
        %2351 = vperm.xlu0 %2350, %v191
        %v2352 = vpop.permute.xlu0 %2351
        %2354 = vset.pattern.permute.xlu0 11
        %2355 = vperm.xlu0 %2354, %v192
        %v2356 = vpop.permute.xlu0 %2355
        %2358 = vset.pattern.permute.xlu0 11
        %2359 = vperm.xlu0 %2358, %v193
        %v2360 = vpop.permute.xlu0 %2359
        %2362 = vset.pattern.permute.xlu0 11
        %2363 = vperm.xlu0 %2362, %v194
        %v2364 = vpop.permute.xlu0 %2363
        %2366 = vset.pattern.permute.xlu0 11
        %2367 = vperm.xlu0 %2366, %v195
        %v2368 = vpop.permute.xlu0 %2367
        %v2386 = vunpack.c.l.b16 %v2282
        %v2387 = vunpack.c.l.b16 %v2283
        %v2388 = vunpack.c.l.b16 %v2284
        %v2389 = vunpack.c.l.b16 %v2285
        %v2390 = vunpack.c.l.b16 %v2286
        %v2391 = vunpack.c.l.b16 %v2287
        %v2392 = vunpack.c.l.b16 %v2288
        %v2393 = vunpack.c.l.b16 %v2289
        %v2394 = vunpack.c.l.b16 %v2290
        %v2395 = vunpack.c.l.b16 %v2291
        %v2396 = vunpack.c.l.b16 %v2292
        %v2397 = vunpack.c.l.b16 %v2293
        %v2398 = vunpack.c.l.b16 %v2294
        %v2399 = vunpack.c.l.b16 %v2295
        %v2400 = vunpack.c.l.b16 %v2296
        %v2401 = vunpack.c.l.b16 %v2297
        %v2402 = vpack.c.b16 %v2387, %v2386
        %v2403 = vpack.c.b16 %v2389, %v2388
        %v2404 = vpack.c.b16 %v2391, %v2390
        %v2405 = vpack.c.b16 %v2393, %v2392
        %v2406 = vpack.c.b16 %v2395, %v2394
        %v2407 = vpack.c.b16 %v2397, %v2396
        %v2408 = vpack.c.b16 %v2399, %v2398
        %v2409 = vpack.c.b16 %v2401, %v2400
        %2418 = vmatprep.subr.bf16.mxu0 0
        %2419 = vmatpush1.bf16.msra.mxu0 %v2298
        %2420 = vmatprep.subr.bf16.mxu0 0
        %2421 = vmatpush1.bf16.msra.mxu0 %v2299
        %2422 = vmatprep.subr.bf16.mxu0 0
        %2423 = vmatpush1.bf16.msra.mxu0 %v2300
        %2424 = vmatprep.subr.bf16.mxu0 0
        %2425 = vmatpush1.bf16.msra.mxu0 %v2301
        %2426 = vmatprep.subr.bf16.mxu0 0
        %2427 = vmatpush1.bf16.msra.mxu0 %v2302
        %2428 = vmatprep.subr.bf16.mxu0 0
        %2429 = vmatpush1.bf16.msra.mxu0 %v2303
        %2430 = vmatprep.subr.bf16.mxu0 0
        %2431 = vmatpush1.bf16.msra.mxu0 %v2304
        %2432 = vmatprep.subr.bf16.mxu0 0
        %2433 = vmatpush1.bf16.msra.mxu0 %v2305
        %2434 = vmatprep.subr.bf16.mxu0 0
        %2435 = vmatpush1.bf16.msra.mxu0 0
        %2436 = vmatprep.subr.bf16.mxu0 0
        %2437 = vmatpush1.bf16.msra.mxu0 0
        %2438 = vmatprep.subr.bf16.mxu0 0
        %2439 = vmatpush1.bf16.msra.mxu0 0
        %2440 = vmatprep.subr.bf16.mxu0 0
        %2441 = vmatpush1.bf16.msra.mxu0 0
        %2442 = vmatprep.subr.bf16.mxu0 0
        %2443 = vmatpush1.bf16.msra.mxu0 0
        %2444 = vmatprep.subr.bf16.mxu0 0
        %2445 = vmatpush1.bf16.msra.mxu0 0
        %2446 = vmatprep.subr.bf16.mxu0 0
        %2447 = vmatpush1.bf16.msra.mxu0 0
        %2448 = vmatprep.subr.bf16.mxu0 0
        %2449 = vmatpush1.bf16.msra.mxu0 0
        %2450 = vmatprep.mubr.bf16.mxu0 0
        %2451 = vmatmul.mubr.bf16.gmra.mrb[0].mxu0 %v2402
        %v2452 = vpop.f32.mrb[0].mxu0
        %v2453 = vadd.f32 %v2308, %v2452
        %v2454 = vpop.f32.mrb[0].mxu0
        %v2455 = vpop.f32.mrb[0].mxu0
        %v2456 = vadd.f32 %v2312, %v2455
        %v2457 = vpop.f32.mrb[0].mxu0
        %2458 = vmatprep.mubr.bf16.mxu0 0
        %2459 = vmatmul.mubr.bf16.gmra.mrb[0].mxu0 %v2403
        %v2460 = vpop.f32.mrb[0].mxu0
        %v2461 = vadd.f32 %v2316, %v2460
        %v2462 = vpop.f32.mrb[0].mxu0
        %v2463 = vpop.f32.mrb[0].mxu0
        %v2464 = vadd.f32 %v2320, %v2463
        %v2465 = vpop.f32.mrb[0].mxu0
        %2466 = vmatprep.mubr.bf16.mxu0 0
        %2467 = vmatmul.mubr.bf16.gmra.mrb[0].mxu0 %v2404
        %v2468 = vpop.f32.mrb[0].mxu0
        %v2469 = vadd.f32 %v2324, %v2468
        %v2470 = vpop.f32.mrb[0].mxu0
        %v2471 = vpop.f32.mrb[0].mxu0
        %v2472 = vadd.f32 %v2328, %v2471
        %v2473 = vpop.f32.mrb[0].mxu0
        %2474 = vmatprep.mubr.bf16.mxu0 0
        %2475 = vmatmul.mubr.bf16.gmra.mrb[0].mxu0 %v2405
        %v2476 = vpop.f32.mrb[0].mxu0
        %v2477 = vadd.f32 %v2332, %v2476
        %v2478 = vpop.f32.mrb[0].mxu0
        %v2479 = vpop.f32.mrb[0].mxu0
        %v2480 = vadd.f32 %v2336, %v2479
        %v2481 = vpop.f32.mrb[0].mxu0
        %2482 = vmatprep.mubr.bf16.mxu0 0
        %2483 = vmatmul.mubr.bf16.gmra.mrb[0].mxu0 %v2406
        %v2484 = vpop.f32.mrb[0].mxu0
        %v2485 = vadd.f32 %v2340, %v2484
        %v2486 = vpop.f32.mrb[0].mxu0
        %v2487 = vpop.f32.mrb[0].mxu0
        %v2488 = vadd.f32 %v2344, %v2487
        %v2489 = vpop.f32.mrb[0].mxu0
        %2490 = vmatprep.mubr.bf16.mxu0 0
        %2491 = vmatmul.mubr.bf16.gmra.mrb[0].mxu0 %v2407
        %v2492 = vpop.f32.mrb[0].mxu0
        %v2493 = vadd.f32 %v2348, %v2492
        %v2494 = vpop.f32.mrb[0].mxu0
        %v2495 = vpop.f32.mrb[0].mxu0
        %v2496 = vadd.f32 %v2352, %v2495
        %v2497 = vpop.f32.mrb[0].mxu0
        %2498 = vmatprep.mubr.bf16.mxu0 0
        %2499 = vmatmul.mubr.bf16.gmra.mrb[0].mxu0 %v2408
        %v2500 = vpop.f32.mrb[0].mxu0
        %v2501 = vadd.f32 %v2356, %v2500
        %v2502 = vpop.f32.mrb[0].mxu0
        %v2503 = vpop.f32.mrb[0].mxu0
        %v2504 = vadd.f32 %v2360, %v2503
        %v2505 = vpop.f32.mrb[0].mxu0
        %2506 = vmatprep.mubr.bf16.mxu0 0
        %2507 = vmatmul.mubr.bf16.gmra.mrb[0].mxu0 %v2409
        %v2508 = vpop.f32.mrb[0].mxu0
        %v2509 = vadd.f32 %v2364, %v2508
        %v2510 = vpop.f32.mrb[0].mxu0
        %v2511 = vpop.f32.mrb[0].mxu0
        %v2512 = vadd.f32 %v2368, %v2511
        %v2513 = vpop.f32.mrb[0].mxu0
        %2514 = vdwg.mxu0
        %v2515 = vmul.f32 %v2453, 0.01
        %v2516 = vmul.f32 %v2456, 0.01
        %v2517 = vmul.f32 %v2461, 0.01
        %v2518 = vmul.f32 %v2464, 0.01
        %v2519 = vmul.f32 %v2469, 0.01
        %v2520 = vmul.f32 %v2472, 0.01
        %v2521 = vmul.f32 %v2477, 0.01
        %v2522 = vmul.f32 %v2480, 0.01
        %v2523 = vmul.f32 %v2485, 0.01
        %v2524 = vmul.f32 %v2488, 0.01
        %v2525 = vmul.f32 %v2493, 0.01
        %v2526 = vmul.f32 %v2496, 0.01
        %v2527 = vmul.f32 %v2501, 0.01
        %v2528 = vmul.f32 %v2504, 0.01
        %v2529 = vmul.f32 %v2509, 0.01
        %v2530 = vmul.f32 %v2512, 0.01
        %v2531 = vmax.f32 %v2453, %v2515
        %v2532 = vmax.f32 %v2456, %v2516
        %v2533 = vmax.f32 %v2461, %v2517
        %v2534 = vmax.f32 %v2464, %v2518
        %v2535 = vmax.f32 %v2469, %v2519
        %v2536 = vmax.f32 %v2472, %v2520
        %v2537 = vmax.f32 %v2477, %v2521
        %v2538 = vmax.f32 %v2480, %v2522
        %v2539 = vmax.f32 %v2485, %v2523
        %v2540 = vmax.f32 %v2488, %v2524
        %v2541 = vmax.f32 %v2493, %v2525
        %v2542 = vmax.f32 %v2496, %v2526
        %v2543 = vmax.f32 %v2501, %v2527
        %v2544 = vmax.f32 %v2504, %v2528
        %v2545 = vmax.f32 %v2509, %v2529
        %v2546 = vmax.f32 %v2512, %v2530
        %v2547 = vld [vmem:[#allocation2 + $0x180] sm:$0x1]
        %v2548 = vpack.c.bf16 %v2532, %v2531
        %v2549 = vpack.c.bf16 %v2534, %v2533
        %v2550 = vpack.c.bf16 %v2536, %v2535
        %v2551 = vpack.c.bf16 %v2538, %v2537
        %v2552 = vpack.c.bf16 %v2540, %v2539
        %v2553 = vpack.c.bf16 %v2542, %v2541
        %v2554 = vpack.c.bf16 %v2544, %v2543
        %v2555 = vpack.c.bf16 %v2546, %v2545
        %v2556 = vld [vmem:[%s2] sm:$0x1]
        %2558 = vset.pattern.permute.xlu0 12
        %2559 = vperm.xlu0 %2558, %v2556
        %v2560 = vpop.permute.xlu0 %2559
        %2562 = vmatprep.subr.bf16.mxu0 0
        %2563 = vmatpush1.bf16.msra.mxu0 %v2548
        %2564 = vmatprep.subr.bf16.mxu0 0
        %2565 = vmatpush1.bf16.msra.mxu0 %v2549
        %2566 = vmatprep.subr.bf16.mxu0 0
        %2567 = vmatpush1.bf16.msra.mxu0 %v2550
        %2568 = vmatprep.subr.bf16.mxu0 0
        %2569 = vmatpush1.bf16.msra.mxu0 %v2551
        %2570 = vmatprep.subr.bf16.mxu0 0
        %2571 = vmatpush1.bf16.msra.mxu0 %v2552
        %2572 = vmatprep.subr.bf16.mxu0 0
        %2573 = vmatpush1.bf16.msra.mxu0 %v2553
        %2574 = vmatprep.subr.bf16.mxu0 0
        %2575 = vmatpush1.bf16.msra.mxu0 %v2554
        %2576 = vmatprep.subr.bf16.mxu0 0
        %2577 = vmatpush1.bf16.msra.mxu0 %v2555
        %2578 = vmatprep.subr.bf16.mxu0 0
        %2579 = vmatpush1.bf16.msra.mxu0 0
        %2580 = vmatprep.subr.bf16.mxu0 0
        %2581 = vmatpush1.bf16.msra.mxu0 0
        %2582 = vmatprep.subr.bf16.mxu0 0
        %2583 = vmatpush1.bf16.msra.mxu0 0
        %2584 = vmatprep.subr.bf16.mxu0 0
        %2585 = vmatpush1.bf16.msra.mxu0 0
        %2586 = vmatprep.subr.bf16.mxu0 0
        %2587 = vmatpush1.bf16.msra.mxu0 0
        %2588 = vmatprep.subr.bf16.mxu0 0
        %2589 = vmatpush1.bf16.msra.mxu0 0
        %2590 = vmatprep.subr.bf16.mxu0 0
        %2591 = vmatpush1.bf16.msra.mxu0 0
        %2592 = vmatprep.subr.bf16.mxu0 0
        %2593 = vmatpush1.bf16.msra.mxu0 0
        %2594 = vmatprep.mubr.bf16.mxu0 0
        %2595 = vmatmul.mubr.bf16.gmra.mrb[0].mxu0 %v2547
        %v2596 = vpop.f32.mrb[0].mxu0
        %v2597 = vadd.f32 %v2560, %v2596
        %v2598 = vpop.f32.mrb[0].mxu0
        %v2599 = vpop.f32.mrb[0].mxu0
        %v2600 = vpop.f32.mrb[0].mxu0
        %2601 = vdwg.mxu0
        %v2602 = vsub.f32 0.0, %v2597
        %v2603 = vmul.f32 %v2602, 1.442695
        %v2604 = vpow.pop %v2603
        %v2605 = vadd.f32 %v2604, 1.0
        %v2606 = vrcp.pop %v2605
        %2607 = vst [vmem:[%s178] sm:$0x1] %v2606
        %p2608 = scmp.lt.s32.totalorder %s15, 1
        %s2609 = scalar_select %p2608, %s15, 1
        %s2610 = scalar_lea.vmem %s3, %s2609
        // Predicated region
        $region37: #{mlp_forward.1} parent=31 // pred_check
          %p2611 = pneg %p101
        $region38: #{mlp_forward.1} parent=31 // pred_check_branch
          %2613 = sbr.rel (%p2611) target = $region40
        $region39: #{mlp_forward.1} parent=31 // pred_region
          _
        $region40: #{mlp_forward.1} parent=31 // pred_fallthru
          _
      $region32: #{mlp_forward.1} parent=5 // pred_fallthru
        _
      %p2614 = scmp.le.s32.totalorder 2, %s10
      // Predicated region
      $region41: #{mlp_forward.1} parent=5 // pred_check
        %p2615 = pneg %p2614
      $region42: #{mlp_forward.1} parent=5 // pred_check_branch
        %2617 = sbr.rel (%p2615) target = $region44
      $region43: #{mlp_forward.1} parent=5 // pred_region
        %s2618 = ssub.s32 %s10, 2
        // Predicated region
        $region45: #{mlp_forward.1} parent=43 // pred_check
          %p2619 = pneg %p107
        $region46: #{mlp_forward.1} parent=43 // pred_check_branch
          %2621 = sbr.rel (%p2619) target = $region48
        $region47: #{mlp_forward.1} parent=43 // pred_region
          %p2622 = scmp.lt.s32.totalorder %s16, 1
          %s2623 = scalar_select %p2622, %s16, 1
          %s2624 = scalar_lea.vmem %s3, %s2623
        $region48: #{mlp_forward.1} parent=43 // pred_fallthru
          _
      $region44: #{mlp_forward.1} parent=5 // pred_fallthru
        _
    $region6: #{mlp_forward.1} parent=1 // loop_footer
      %s14 = sadd.s32 1, %s10
    $region7: #{mlp_forward.1} parent=1 // loop_footer_branch
      %9 = sbr.rel target = $region3
    $region8: #{mlp_forward.1} parent=1 // loop_exit
      _
    %2625 = vsyncpa [#allocation3], 1
    %s2626 = scalar_lea.sflag [#allocation3], 1
    %2627 = vsyncpa %s2626, 1

</llo_original>
